<compile_context>
chip_gen: v7x
topology: tpu7x:2x2x1
jax: 0.10.0
libtpu: 0.0.40
codegen_flags: <defaults>
</compile_context>

<pallas_src>
import jax
import jax.numpy as jnp
from jax.experimental import pallas as pl
from jax.experimental.pallas import tpu as pltpu

EPS = 1e-5
C_TILE = 64  # channels per grid step -> grid of 2 parallel steps for C=128


def _bn_relu_kernel(x_ref, gamma_ref, beta_ref, o_ref):
    # x_ref: (C_TILE, N*H*W) fp32, one row per channel.
    x = x_ref[...]
    n = x.shape[1]
    inv_n = 1.0 / n

    # Two-pass biased statistics (matches PyTorch batch-norm forward).
    mean = jnp.sum(x, axis=1, keepdims=True) * inv_n            # (C_TILE, 1)
    centered = x - mean
    var = jnp.sum(centered * centered, axis=1, keepdims=True) * inv_n
    inv_std = jax.lax.rsqrt(var + EPS)                          # (C_TILE, 1)

    # Fold normalize + affine into one per-channel FMA.
    scale = gamma_ref[...] * inv_std                            # (C_TILE, 1)
    shift = beta_ref[...] - mean * scale                        # (C_TILE, 1)
    o_ref[...] = jnp.maximum(x * scale + shift, 0.0)


def batchnorm_relu(x_nchw, gamma, beta):
    """x_nchw: (N, C, H, W) float32; gamma/beta: (C,) float32."""
    N, C, H, W = x_nchw.shape
    assert C % C_TILE == 0, f"C={C} must be a multiple of C_TILE={C_TILE}"
    nhw = N * H * W

    # Channels-major slab: (C, N*H*W).  For N=1 this is just a reshape.
    x_cm = jnp.transpose(x_nchw, (1, 0, 2, 3)).reshape(C, nhw)
    g = gamma.reshape(C, 1).astype(jnp.float32)
    b = beta.reshape(C, 1).astype(jnp.float32)

    out_cm = pl.pallas_call(
        _bn_relu_kernel,
        out_shape=jax.ShapeDtypeStruct((C, nhw), jnp.float32),
        grid=(C // C_TILE,),
        in_specs=[
            pl.BlockSpec((C_TILE, nhw), lambda i: (i, 0)),
            pl.BlockSpec((C_TILE, 1), lambda i: (i, 0)),
            pl.BlockSpec((C_TILE, 1), lambda i: (i, 0)),
        ],
        out_specs=pl.BlockSpec((C_TILE, nhw), lambda i: (i, 0)),
        compiler_params=pltpu.CompilerParams(
            dimension_semantics=("parallel",)
        ),
    )(x_cm, g, b)

    # Back to NCHW.
    return jnp.transpose(out_cm.reshape(C, N, H, W), (1, 0, 2, 3))


def _reference(x_nchw, gamma, beta):
    mean = jnp.mean(x_nchw, axis=(0, 2, 3), keepdims=True)
    var = jnp.mean((x_nchw - mean) ** 2, axis=(0, 2, 3), keepdims=True)
    y = (x_nchw - mean) * jax.lax.rsqrt(var + EPS)
    y = y * gamma.reshape(1, -1, 1, 1) + beta.reshape(1, -1, 1, 1)
    return jnp.maximum(y, 0.0)


if __name__ == "__main__":
    key = jax.random.PRNGKey(0)
    kx, kg, kb = jax.random.split(key, 3)

    N, C, H, W = 1, 128, 56, 56  # matches BatchNorm2d(128) and the module's input
    x = jax.random.normal(kx, (N, C, H, W), dtype=jnp.float32)
    gamma = 1.0 + 0.1 * jax.random.normal(kg, (C,), dtype=jnp.float32)
    beta = 0.1 * jax.random.normal(kb, (C,), dtype=jnp.float32)

    out = batchnorm_relu(x, gamma, beta)
    out = jax.block_until_ready(out)

    ref = _reference(x, gamma, beta)
    assert out.shape == (N, C, H, W)
    assert jnp.max(jnp.abs(out - ref)) < 1e-4

    print("KERNEL_OK")
</pallas_src>

<mosaic_0001>
module attributes {stable_mosaic.version = 11 : i64} {
  func.func @_bn_relu_kernel(%arg0: i32, %arg1: memref<64x3136xf32, #tpu.memory_space<vmem>>, %arg2: memref<64x1xf32, #tpu.memory_space<vmem>>, %arg3: memref<64x1xf32, #tpu.memory_space<vmem>>, %arg4: memref<64x3136xf32, #tpu.memory_space<vmem>>) attributes {dimension_semantics = [#tpu.dimension_semantics<parallel>], iteration_bounds = array<i64: 2>, scalar_prefetch = 0 : i64, scratch_operands = 0 : i64, tpu.core_type = #tpu.core_type<tc>, window_params = [{transform_indices = @transform_0, window_bounds = array<i64: 64, 3136>}, {transform_indices = @transform_1, window_bounds = array<i64: 64, 1>}, {transform_indices = @transform_2, window_bounds = array<i64: 64, 1>}, {transform_indices = @transform_3, window_bounds = array<i64: 64, 3136>}]} {
    %c0 = arith.constant 0 : index
    %c0_0 = arith.constant 0 : index
    %0 = vector.load %arg1[%c0, %c0_0] : memref<64x3136xf32, #tpu.memory_space<vmem>>, vector<64x3136xf32>
    %cst = arith.constant dense<0.000000e+00> : vector<64xf32>
    %1 = vector.multi_reduction <add>, %0, %cst [1] : vector<64x3136xf32> to vector<64xf32>
    %2 = vector.shape_cast %1 : vector<64xf32> to vector<64x1xf32>
    %cst_1 = arith.constant 3.18877544E-4 : f32
    %3 = vector.broadcast %cst_1 : f32 to vector<64x1xf32>
    %4 = arith.mulf %2, %3 : vector<64x1xf32>
    %5 = vector.broadcast %4 : vector<64x1xf32> to vector<64x3136xf32>
    %6 = arith.subf %0, %5 : vector<64x3136xf32>
    %7 = arith.mulf %6, %6 : vector<64x3136xf32>
    %cst_2 = arith.constant dense<0.000000e+00> : vector<64xf32>
    %8 = vector.multi_reduction <add>, %7, %cst_2 [1] : vector<64x3136xf32> to vector<64xf32>
    %9 = vector.shape_cast %8 : vector<64xf32> to vector<64x1xf32>
    %cst_3 = arith.constant 3.18877544E-4 : f32
    %10 = vector.broadcast %cst_3 : f32 to vector<64x1xf32>
    %11 = arith.mulf %9, %10 : vector<64x1xf32>
    %cst_4 = arith.constant 9.99999974E-6 : f32
    %12 = vector.broadcast %cst_4 : f32 to vector<64x1xf32>
    %13 = arith.addf %11, %12 : vector<64x1xf32>
    %14 = math.rsqrt %13 : vector<64x1xf32>
    %c0_5 = arith.constant 0 : index
    %c0_6 = arith.constant 0 : index
    %15 = vector.load %arg2[%c0_5, %c0_6] : memref<64x1xf32, #tpu.memory_space<vmem>>, vector<64x1xf32>
    %16 = arith.mulf %15, %14 : vector<64x1xf32>
    %c0_7 = arith.constant 0 : index
    %c0_8 = arith.constant 0 : index
    %17 = vector.load %arg3[%c0_7, %c0_8] : memref<64x1xf32, #tpu.memory_space<vmem>>, vector<64x1xf32>
    %18 = arith.mulf %4, %16 : vector<64x1xf32>
    %19 = arith.subf %17, %18 : vector<64x1xf32>
    %20 = vector.broadcast %16 : vector<64x1xf32> to vector<64x3136xf32>
    %21 = arith.mulf %0, %20 : vector<64x3136xf32>
    %22 = vector.broadcast %19 : vector<64x1xf32> to vector<64x3136xf32>
    %23 = arith.addf %21, %22 : vector<64x3136xf32>
    %cst_9 = arith.constant 0.000000e+00 : f32
    %24 = vector.broadcast %cst_9 : f32 to vector<64x3136xf32>
    %25 = arith.maximumf %23, %24 : vector<64x3136xf32>
    %c0_10 = arith.constant 0 : index
    %c0_11 = arith.constant 0 : index
    %26 = vector.load %arg4[%c0_10, %c0_11] : memref<64x3136xf32, #tpu.memory_space<vmem>>, vector<64x3136xf32>
    tpu.vector_store %arg4[%c0_10, %c0_11], %25 {strides = array<i32>} : memref<64x3136xf32, #tpu.memory_space<vmem>>, vector<64x3136xf32>,
    return
  }
  func.func @transform_0(%arg0: i32) -> (i32, i32) {
    %c0_i32 = arith.constant 0 : i32
    %c0_i32_0 = arith.constant 0 : i32
    return %arg0, %c0_i32 : i32, i32
  }
  func.func @transform_1(%arg0: i32) -> (i32, i32) {
    %c0_i32 = arith.constant 0 : i32
    %c0_i32_0 = arith.constant 0 : i32
    return %arg0, %c0_i32 : i32, i32
  }
  func.func @transform_2(%arg0: i32) -> (i32, i32) {
    %c0_i32 = arith.constant 0 : i32
    %c0_i32_0 = arith.constant 0 : i32
    return %arg0, %c0_i32 : i32, i32
  }
  func.func @transform_3(%arg0: i32) -> (i32, i32) {
    %c0_i32 = arith.constant 0 : i32
    %c0_i32_0 = arith.constant 0 : i32
    return %arg0, %c0_i32 : i32, i32
  }
}

</mosaic_0001>

<llo_original>
// kernel: tpu_custom_call.1
$region0: #{tpu_custom_call.1}
  #allocation0 [shape = 'u32[]', space=smem, size = 0x4, offset = 0x4, fixed_abs, tag = 'smem constant byte address 0x4 - core index']
  #allocation1 [shape = 'u32[144,128]{1,0:T(1,128)}', space=vmem, size = 0x12000, scoped, tag = 'internal scratch']
  %s0 = inlined_call_operand.vmem [shape: f32[128,3136], index: 0, kind: input, shape index: {}]
  %s1 = inlined_call_operand.vmem [shape: f32[128,1], index: 1, kind: input, shape index: {}]
  %s2 = inlined_call_operand.vmem [shape: f32[128,1], index: 2, kind: input, shape index: {}]
  %s3 = inlined_call_operand.vmem [shape: f32[128,3136], index: 3, kind: output, shape index: {}]
  %s4 = sld [smem:[#allocation0]]
  $region45: #{tpu_custom_call.1} parent=0
    _
  %s6 = ssub.s32 1, %s4
  %s7 = scalar_select 0, %s6, %s4
  loop: start=0, step=1, limit=4
  $region2: #{tpu_custom_call.1} parent=0 // loop_pre_header
    _
  $region3: #{tpu_custom_call.1} parent=0 // loop_header
    %s9 = sphi 0, %s13
    %p10 = scmp.ge.s32.totalorder %s9, 4
    %s19 = sphi 0, %s21
    %s22 = sphi 0, %s19
    %s23 = sphi 0, %s22
    %s39 = sphi 0, %s23
    %s45 = sphi 0, %s47
    %s48 = sphi 0, %s45
    %s49 = sphi 0, %s48
    %s65 = sphi 0, %s49
    %s71 = sphi 0, %s73
    %s74 = sphi 0, %s71
    %s75 = sphi 0, %s74
    %s91 = sphi 0, %s75
    %s97 = sphi 0, %s99
    %s100 = sphi 0, %s97
    %s101 = sphi 0, %s100
    %s117 = sphi 0, %s101
  $region4: #{tpu_custom_call.1} parent=0 // loop_header_branch
    %12 = sbr.rel (%p10) target = $region8
  $region5: #{tpu_custom_call.1} parent=0 // loop_body
    %s14 = ssub.s32 %s9, 1
    %s15 = ssub.s32 %s9, 2
    %s16 = sadd.s32 %s9, 1
    %s17 = ssub.s32 %s9, %s16
    %p18 = scmp.eq.s32.totalorder %s17, 0
    %s20 = sadd.s32 %s19, 1
    %s21 = scalar_select %p18, %s19, %s20
    %p24 = pneg %p18
    %p25 = scmp.eq.s32.totalorder %s9, 1
    %p26 = por %p24, %p25
    %p27 = scmp.ne.s32.totalorder %s19, %s22
    %p28 = scmp.eq.s32.totalorder %s9, 0
    %p29 = por %p27, %p28
    %p30 = scmp.ne.s32.totalorder %s19, %s22
    %p31 = scmp.eq.s32.totalorder %s14, 1
    %p32 = por %p30, %p31
    %p33 = scmp.ne.s32.totalorder %s22, %s23
    %p34 = scmp.eq.s32.totalorder %s14, 0
    %p35 = por %p33, %p34
    %p36 = scmp.ne.s32.totalorder %s22, %s23
    %p37 = scmp.eq.s32.totalorder %s15, 1
    %p38 = por %p36, %p37
    %p40 = scmp.ne.s32.totalorder %s23, %s39
    %p41 = scmp.eq.s32.totalorder %s15, 0
    %p42 = por %p40, %p41
    %s43 = ssub.s32 %s9, %s16
    %p44 = scmp.eq.s32.totalorder %s43, 0
    %s46 = sadd.s32 %s45, 1
    %s47 = scalar_select %p44, %s45, %s46
    %p50 = pneg %p44
    %p51 = scmp.eq.s32.totalorder %s9, 1
    %p52 = por %p50, %p51
    %p53 = scmp.ne.s32.totalorder %s45, %s48
    %p54 = scmp.eq.s32.totalorder %s9, 0
    %p55 = por %p53, %p54
    %p56 = scmp.ne.s32.totalorder %s45, %s48
    %p57 = scmp.eq.s32.totalorder %s14, 1
    %p58 = por %p56, %p57
    %p59 = scmp.ne.s32.totalorder %s48, %s49
    %p60 = scmp.eq.s32.totalorder %s14, 0
    %p61 = por %p59, %p60
    %p62 = scmp.ne.s32.totalorder %s48, %s49
    %p63 = scmp.eq.s32.totalorder %s15, 1
    %p64 = por %p62, %p63
    %p66 = scmp.ne.s32.totalorder %s49, %s65
    %p67 = scmp.eq.s32.totalorder %s15, 0
    %p68 = por %p66, %p67
    %s69 = ssub.s32 %s9, %s16
    %p70 = scmp.eq.s32.totalorder %s69, 0
    %s72 = sadd.s32 %s71, 1
    %s73 = scalar_select %p70, %s71, %s72
    %p76 = pneg %p70
    %p77 = scmp.eq.s32.totalorder %s9, 1
    %p78 = por %p76, %p77
    %p79 = scmp.ne.s32.totalorder %s71, %s74
    %p80 = scmp.eq.s32.totalorder %s9, 0
    %p81 = por %p79, %p80
    %p82 = scmp.ne.s32.totalorder %s71, %s74
    %p83 = scmp.eq.s32.totalorder %s14, 1
    %p84 = por %p82, %p83
    %p85 = scmp.ne.s32.totalorder %s74, %s75
    %p86 = scmp.eq.s32.totalorder %s14, 0
    %p87 = por %p85, %p86
    %p88 = scmp.ne.s32.totalorder %s74, %s75
    %p89 = scmp.eq.s32.totalorder %s15, 1
    %p90 = por %p88, %p89
    %p92 = scmp.ne.s32.totalorder %s75, %s91
    %p93 = scmp.eq.s32.totalorder %s15, 0
    %p94 = por %p92, %p93
    %s95 = ssub.s32 %s9, %s16
    %p96 = scmp.eq.s32.totalorder %s95, 0
    %s98 = sadd.s32 %s97, 1
    %s99 = scalar_select %p96, %s97, %s98
    %p102 = pneg %p96
    %p103 = scmp.eq.s32.totalorder %s9, 1
    %p104 = por %p102, %p103
    %p105 = scmp.ne.s32.totalorder %s97, %s100
    %p106 = scmp.eq.s32.totalorder %s9, 0
    %p107 = por %p105, %p106
    %p108 = scmp.ne.s32.totalorder %s97, %s100
    %p109 = scmp.eq.s32.totalorder %s14, 1
    %p110 = por %p108, %p109
    %p111 = scmp.ne.s32.totalorder %s100, %s101
    %p112 = scmp.eq.s32.totalorder %s14, 0
    %p113 = por %p111, %p112
    %p114 = scmp.ne.s32.totalorder %s100, %s101
    %p115 = scmp.eq.s32.totalorder %s15, 1
    %p116 = por %p114, %p115
    %p118 = scmp.ne.s32.totalorder %s101, %s117
    %p119 = scmp.eq.s32.totalorder %s15, 0
    %p120 = por %p118, %p119
    %p121 = scmp.le.s32.totalorder 1, %s9
    %p122 = scmp.lt.s32.totalorder %s9, 3
    %p123 = pnand %p121, %p122
    %p124 = pneg %p123
    // Predicated region
    $region9: #{tpu_custom_call.1} parent=5 // pred_check
      _
    $region10: #{tpu_custom_call.1} parent=5 // pred_check_branch
      %126 = sbr.rel (%p123) target = $region12
    $region11: #{tpu_custom_call.1} parent=5 // pred_region
      %s127 = ssub.s32 %s9, 1
    $region12: #{tpu_custom_call.1} parent=5 // pred_fallthru
      _
    %p128 = scmp.lt.s32.totalorder %s9, 2
    // Predicated region
    $region13: #{tpu_custom_call.1} parent=5 // pred_check
      %p129 = pneg %p128
    $region14: #{tpu_custom_call.1} parent=5 // pred_check_branch
      %131 = sbr.rel (%p129) target = $region16
    $region15: #{tpu_custom_call.1} parent=5 // pred_region
      // Predicated region
      $region17: #{tpu_custom_call.1} parent=15 // pred_check
        %p132 = pneg %p29
      $region18: #{tpu_custom_call.1} parent=15 // pred_check_branch
        %134 = sbr.rel (%p132) target = $region20
      $region19: #{tpu_custom_call.1} parent=15 // pred_region
        %s135 = smul.u32 8, %s9
        %p136 = scmp.lt.s32.totalorder %s135, 15
        %s137 = scalar_select %p136, %s135, 15
        %s138 = smul.addr %s137, 25
        %s139 = smul.addr %s138, 8
        %s140 = scalar_lea.vmem %s0, %s139
        %s141 = smul.u32 8, %s9
      $region20: #{tpu_custom_call.1} parent=15 // pred_fallthru
        _
      // Predicated region
      $region21: #{tpu_custom_call.1} parent=15 // pred_check
        %p142 = pneg %p55
      $region22: #{tpu_custom_call.1} parent=15 // pred_check_branch
        %144 = sbr.rel (%p142) target = $region24
      $region23: #{tpu_custom_call.1} parent=15 // pred_region
        %s145 = smul.u32 8, %s9
        %p146 = scmp.lt.s32.totalorder %s145, 15
        %s147 = scalar_select %p146, %s145, 15
        %s148 = smul.addr %s147, 8
        %s149 = scalar_lea.vmem %s1, %s148
        %s150 = smul.u32 8, %s9
      $region24: #{tpu_custom_call.1} parent=15 // pred_fallthru
        _
      // Predicated region
      $region25: #{tpu_custom_call.1} parent=15 // pred_check
        %p151 = pneg %p81
      $region26: #{tpu_custom_call.1} parent=15 // pred_check_branch
        %153 = sbr.rel (%p151) target = $region28
      $region27: #{tpu_custom_call.1} parent=15 // pred_region
        %s154 = smul.u32 8, %s9
        %p155 = scmp.lt.s32.totalorder %s154, 15
        %s156 = scalar_select %p155, %s154, 15
        %s157 = smul.addr %s156, 8
        %s158 = scalar_lea.vmem %s2, %s157
        %s159 = smul.u32 8, %s9
      $region28: #{tpu_custom_call.1} parent=15 // pred_fallthru
        _
    $region16: #{tpu_custom_call.1} parent=5 // pred_fallthru
      _
    %p160 = scmp.le.s32.totalorder 1, %s9
    %p161 = scmp.lt.s32.totalorder %s9, 3
    %p162 = pnand %p160, %p161
    %p163 = pneg %p162
    // Predicated region
    $region29: #{tpu_custom_call.1} parent=5 // pred_check
      _
    $region30: #{tpu_custom_call.1} parent=5 // pred_check_branch
      %165 = sbr.rel (%p162) target = $region32
    $region31: #{tpu_custom_call.1} parent=5 // pred_region
      %s166 = ssub.s32 %s9, 1
      %s167 = smul.u32 8, %s14
      %p168 = scmp.lt.s32.totalorder %s167, 15
      %s169 = scalar_select %p168, %s167, 15
      %s170 = smul.addr %s169, 25
      %s171 = smul.addr %s170, 8
      %s172 = scalar_lea.vmem %s0, %s171
      %p173 = pneg %p35
      %p174 = pneg %p32
      %s175 = smul.u32 8, %s14
      %p176 = scmp.lt.s32.totalorder %s175, 15
      %s177 = scalar_select %p176, %s175, 15
      %s178 = smul.addr %s177, 8
      %s179 = scalar_lea.vmem %s1, %s178
      %p180 = pneg %p61
      %p181 = pneg %p58
      %s182 = smul.u32 8, %s14
      %p183 = scmp.lt.s32.totalorder %s182, 15
      %s184 = scalar_select %p183, %s182, 15
      %s185 = smul.addr %s184, 8
      %s186 = scalar_lea.vmem %s2, %s185
      %p187 = pneg %p87
      %p188 = pneg %p84
      %p189 = pneg %p113
      %p190 = pneg %p110
      %s191 = smul.u32 8, %s14
      %p192 = scmp.lt.s32.totalorder %s191, 15
      %s193 = scalar_select %p192, %s191, 15
      %s194 = smul.addr %s193, 25
      %s195 = smul.addr %s194, 8
      %s196 = scalar_lea.vmem %s3, %s195
      %s197 = smul.u32 8, %s14
      %p198 = scmp.lt.s32.totalorder %s197, 15
      %s199 = scalar_select %p198, %s197, 15
      %s200 = smul.addr %s199, 25
      %s201 = smul.addr %s200, 8
      %s202 = scalar_lea.vmem %s0, %s201
      %s203 = smul.u32 8, %s14
      %s204 = smul.u32 8, %s14
      %p205 = scmp.lt.s32.totalorder %s204, 15
      %s206 = scalar_select %p205, %s204, 15
      %s207 = smul.addr %s206, 8
      %s208 = scalar_lea.vmem %s1, %s207
      %s209 = smul.u32 8, %s14
      %s210 = smul.u32 8, %s14
      %p211 = scmp.lt.s32.totalorder %s210, 15
      %s212 = scalar_select %p211, %s210, 15
      %s213 = smul.addr %s212, 8
      %s214 = scalar_lea.vmem %s2, %s213
      %s215 = smul.u32 8, %s14
      %s216 = smul.u32 8, %s14
      %p217 = scmp.lt.s32.totalorder %s216, 15
      %s218 = scalar_select %p217, %s216, 15
      %s219 = smul.addr %s218, 25
      %s220 = smul.addr %s219, 8
      %s221 = scalar_lea.vmem %s3, %s220
      %s222 = smul.u32 8, %s14
      %v223 = vld [vmem:[%s202] sm:$0xff]
      %v224 = vld [vmem:[%s202 + $0x8] sm:$0xff]
      %v225 = vld [vmem:[%s202 + $0x10] sm:$0xff]
      %v226 = vld [vmem:[%s202 + $0x18] sm:$0xff]
      %v227 = vld [vmem:[%s202 + $0x20] sm:$0xff]
      %v228 = vld [vmem:[%s202 + $0x28] sm:$0xff]
      %v229 = vld [vmem:[%s202 + $0x30] sm:$0xff]
      %v230 = vld [vmem:[%s202 + $0x38] sm:$0xff]
      %v231 = vld [vmem:[%s202 + $0x40] sm:$0xff]
      %v232 = vld [vmem:[%s202 + $0x48] sm:$0xff]
      %v233 = vld [vmem:[%s202 + $0x50] sm:$0xff]
      %v234 = vld [vmem:[%s202 + $0x58] sm:$0xff]
      %v235 = vld [vmem:[%s202 + $0x60] sm:$0xff]
      %v236 = vld [vmem:[%s202 + $0x68] sm:$0xff]
      %v237 = vld [vmem:[%s202 + $0x70] sm:$0xff]
      %v238 = vld [vmem:[%s202 + $0x78] sm:$0xff]
      %v239 = vld [vmem:[%s202 + $0x80] sm:$0xff]
      %v240 = vld [vmem:[%s202 + $0x88] sm:$0xff]
      %v241 = vld [vmem:[%s202 + $0x90] sm:$0xff]
      %v242 = vld [vmem:[%s202 + $0x98] sm:$0xff]
      %v243 = vld [vmem:[%s202 + $0xa0] sm:$0xff]
      %v244 = vld [vmem:[%s202 + $0xa8] sm:$0xff]
      %v245 = vld [vmem:[%s202 + $0xb0] sm:$0xff]
      %v246 = vld [vmem:[%s202 + $0xb8] sm:$0xff]
      %v247 = vld [vmem:[%s202 + $0xc0] sm:$0xff]
      %v248 = vld [vmem:[%s202 + $0xc8] sm:$0xff]
      %v249 = vld [vmem:[%s202 + $0xd0] sm:$0xff]
      %v250 = vld [vmem:[%s202 + $0xd8] sm:$0xff]
      %v251 = vld [vmem:[%s202 + $0xe0] sm:$0xff]
      %v252 = vld [vmem:[%s202 + $0xe8] sm:$0xff]
      %v253 = vld [vmem:[%s202 + $0xf0] sm:$0xff]
      %v254 = vld [vmem:[%s202 + $0xf8] sm:$0xff]
      %v255 = vld [vmem:[%s202 + $0x100] sm:$0xff]
      %v256 = vld [vmem:[%s202 + $0x108] sm:$0xff]
      %v257 = vld [vmem:[%s202 + $0x110] sm:$0xff]
      %v258 = vld [vmem:[%s202 + $0x118] sm:$0xff]
      %v259 = vld [vmem:[%s202 + $0x120] sm:$0xff]
      %v260 = vld [vmem:[%s202 + $0x128] sm:$0xff]
      %v261 = vld [vmem:[%s202 + $0x130] sm:$0xff]
      %v262 = vld [vmem:[%s202 + $0x138] sm:$0xff]
      %v263 = vld [vmem:[%s202 + $0x140] sm:$0xff]
      %v264 = vld [vmem:[%s202 + $0x148] sm:$0xff]
      %v265 = vld [vmem:[%s202 + $0x150] sm:$0xff]
      %v266 = vld [vmem:[%s202 + $0x158] sm:$0xff]
      %v267 = vld [vmem:[%s202 + $0x160] sm:$0xff]
      %v268 = vld [vmem:[%s202 + $0x168] sm:$0xff]
      %v269 = vld [vmem:[%s202 + $0x170] sm:$0xff]
      %v270 = vld [vmem:[%s202 + $0x178] sm:$0xff]
      %v271 = vld [vmem:[%s202 + $0x180] sm:$0xff]
      %v272 = vld [vmem:[%s202 + $0x188] sm:$0xff]
      %v273 = vld [vmem:[%s202 + $0x190] sm:$0xff]
      %v274 = vld [vmem:[%s202 + $0x198] sm:$0xff]
      %v275 = vld [vmem:[%s202 + $0x1a0] sm:$0xff]
      %v276 = vld [vmem:[%s202 + $0x1a8] sm:$0xff]
      %v277 = vld [vmem:[%s202 + $0x1b0] sm:$0xff]
      %v278 = vld [vmem:[%s202 + $0x1b8] sm:$0xff]
      %v279 = vld [vmem:[%s202 + $0x1c0] sm:$0xff]
      %v280 = vld [vmem:[%s202 + $0x1c8] sm:$0xff]
      %v281 = vld [vmem:[%s202 + $0x1d0] sm:$0xff]
      %v282 = vld [vmem:[%s202 + $0x1d8] sm:$0xff]
      %v283 = vld [vmem:[%s202 + $0x1e0] sm:$0xff]
      %v284 = vld [vmem:[%s202 + $0x1e8] sm:$0xff]
      %v285 = vld [vmem:[%s202 + $0x1f0] sm:$0xff]
      %v286 = vld [vmem:[%s202 + $0x1f8] sm:$0xff]
      %v287 = vld [vmem:[%s202 + $0x200] sm:$0xff]
      %v288 = vld [vmem:[%s202 + $0x208] sm:$0xff]
      %v289 = vld [vmem:[%s202 + $0x210] sm:$0xff]
      %v290 = vld [vmem:[%s202 + $0x218] sm:$0xff]
      %v291 = vld [vmem:[%s202 + $0x220] sm:$0xff]
      %v292 = vld [vmem:[%s202 + $0x228] sm:$0xff]
      %v293 = vld [vmem:[%s202 + $0x230] sm:$0xff]
      %v294 = vld [vmem:[%s202 + $0x238] sm:$0xff]
      %v295 = vld [vmem:[%s202 + $0x240] sm:$0xff]
      %v296 = vld [vmem:[%s202 + $0x248] sm:$0xff]
      %v297 = vld [vmem:[%s202 + $0x250] sm:$0xff]
      %v298 = vld [vmem:[%s202 + $0x258] sm:$0xff]
      %v299 = vld [vmem:[%s202 + $0x260] sm:$0xff]
      %v300 = vld [vmem:[%s202 + $0x268] sm:$0xff]
      %v301 = vld [vmem:[%s202 + $0x270] sm:$0xff]
      %v302 = vld [vmem:[%s202 + $0x278] sm:$0xff]
      %v303 = vld [vmem:[%s202 + $0x280] sm:$0xff]
      %v304 = vld [vmem:[%s202 + $0x288] sm:$0xff]
      %v305 = vld [vmem:[%s202 + $0x290] sm:$0xff]
      %v306 = vld [vmem:[%s202 + $0x298] sm:$0xff]
      %v307 = vld [vmem:[%s202 + $0x2a0] sm:$0xff]
      %v308 = vld [vmem:[%s202 + $0x2a8] sm:$0xff]
      %v309 = vld [vmem:[%s202 + $0x2b0] sm:$0xff]
      %v310 = vld [vmem:[%s202 + $0x2b8] sm:$0xff]
      %v311 = vld [vmem:[%s202 + $0x2c0] sm:$0xff]
      %v312 = vld [vmem:[%s202 + $0x2c8] sm:$0xff]
      %v313 = vld [vmem:[%s202 + $0x2d0] sm:$0xff]
      %v314 = vld [vmem:[%s202 + $0x2d8] sm:$0xff]
      %v315 = vld [vmem:[%s202 + $0x2e0] sm:$0xff]
      %v316 = vld [vmem:[%s202 + $0x2e8] sm:$0xff]
      %v317 = vld [vmem:[%s202 + $0x2f0] sm:$0xff]
      %v318 = vld [vmem:[%s202 + $0x2f8] sm:$0xff]
      %v319 = vld [vmem:[%s202 + $0x300] sm:$0xff]
      %v320 = vld [vmem:[%s202 + $0x308] sm:$0xff]
      %v321 = vld [vmem:[%s202 + $0x310] sm:$0xff]
      %v322 = vld [vmem:[%s202 + $0x318] sm:$0xff]
      %v323 = vld [vmem:[%s202 + $0x320] sm:$0xff]
      %v324 = vld [vmem:[%s202 + $0x328] sm:$0xff]
      %v325 = vld [vmem:[%s202 + $0x330] sm:$0xff]
      %v326 = vld [vmem:[%s202 + $0x338] sm:$0xff]
      %v327 = vld [vmem:[%s202 + $0x340] sm:$0xff]
      %v328 = vld [vmem:[%s202 + $0x348] sm:$0xff]
      %v329 = vld [vmem:[%s202 + $0x350] sm:$0xff]
      %v330 = vld [vmem:[%s202 + $0x358] sm:$0xff]
      %v331 = vld [vmem:[%s202 + $0x360] sm:$0xff]
      %v332 = vld [vmem:[%s202 + $0x368] sm:$0xff]
      %v333 = vld [vmem:[%s202 + $0x370] sm:$0xff]
      %v334 = vld [vmem:[%s202 + $0x378] sm:$0xff]
      %v335 = vld [vmem:[%s202 + $0x380] sm:$0xff]
      %v336 = vld [vmem:[%s202 + $0x388] sm:$0xff]
      %v337 = vld [vmem:[%s202 + $0x390] sm:$0xff]
      %v338 = vld [vmem:[%s202 + $0x398] sm:$0xff]
      %v339 = vld [vmem:[%s202 + $0x3a0] sm:$0xff]
      %v340 = vld [vmem:[%s202 + $0x3a8] sm:$0xff]
      %v341 = vld [vmem:[%s202 + $0x3b0] sm:$0xff]
      %v342 = vld [vmem:[%s202 + $0x3b8] sm:$0xff]
      %v343 = vld [vmem:[%s202 + $0x3c0] sm:$0xff]
      %v344 = vld [vmem:[%s202 + $0x3c8] sm:$0xff]
      %v345 = vld [vmem:[%s202 + $0x3d0] sm:$0xff]
      %v346 = vld [vmem:[%s202 + $0x3d8] sm:$0xff]
      %v347 = vld [vmem:[%s202 + $0x3e0] sm:$0xff]
      %v348 = vld [vmem:[%s202 + $0x3e8] sm:$0xff]
      %v349 = vld [vmem:[%s202 + $0x3f0] sm:$0xff]
      %v350 = vld [vmem:[%s202 + $0x3f8] sm:$0xff]
      %v351 = vld [vmem:[%s202 + $0x400] sm:$0xff]
      %v352 = vld [vmem:[%s202 + $0x408] sm:$0xff]
      %v353 = vld [vmem:[%s202 + $0x410] sm:$0xff]
      %v354 = vld [vmem:[%s202 + $0x418] sm:$0xff]
      %v355 = vld [vmem:[%s202 + $0x420] sm:$0xff]
      %v356 = vld [vmem:[%s202 + $0x428] sm:$0xff]
      %v357 = vld [vmem:[%s202 + $0x430] sm:$0xff]
      %v358 = vld [vmem:[%s202 + $0x438] sm:$0xff]
      %v359 = vld [vmem:[%s202 + $0x440] sm:$0xff]
      %v360 = vld [vmem:[%s202 + $0x448] sm:$0xff]
      %v361 = vld [vmem:[%s202 + $0x450] sm:$0xff]
      %v362 = vld [vmem:[%s202 + $0x458] sm:$0xff]
      %v363 = vld [vmem:[%s202 + $0x460] sm:$0xff]
      %v364 = vld [vmem:[%s202 + $0x468] sm:$0xff]
      %v365 = vld [vmem:[%s202 + $0x470] sm:$0xff]
      %v366 = vld [vmem:[%s202 + $0x478] sm:$0xff]
      %v367 = vld [vmem:[%s202 + $0x480] sm:$0xff]
      %v368 = vld [vmem:[%s202 + $0x488] sm:$0xff]
      %v369 = vld [vmem:[%s202 + $0x490] sm:$0xff]
      %v370 = vld [vmem:[%s202 + $0x498] sm:$0xff]
      %v371 = vld [vmem:[%s202 + $0x4a0] sm:$0xff]
      %v372 = vld [vmem:[%s202 + $0x4a8] sm:$0xff]
      %v373 = vld [vmem:[%s202 + $0x4b0] sm:$0xff]
      %v374 = vld [vmem:[%s202 + $0x4b8] sm:$0xff]
      %v375 = vld [vmem:[%s202 + $0x4c0] sm:$0xff]
      %v376 = vld [vmem:[%s202 + $0x4c8] sm:$0xff]
      %v377 = vld [vmem:[%s202 + $0x4d0] sm:$0xff]
      %v378 = vld [vmem:[%s202 + $0x4d8] sm:$0xff]
      %v379 = vld [vmem:[%s202 + $0x4e0] sm:$0xff]
      %v380 = vld [vmem:[%s202 + $0x4e8] sm:$0xff]
      %v381 = vld [vmem:[%s202 + $0x4f0] sm:$0xff]
      %v382 = vld [vmem:[%s202 + $0x4f8] sm:$0xff]
      %v383 = vld [vmem:[%s202 + $0x500] sm:$0xff]
      %v384 = vld [vmem:[%s202 + $0x508] sm:$0xff]
      %v385 = vld [vmem:[%s202 + $0x510] sm:$0xff]
      %v386 = vld [vmem:[%s202 + $0x518] sm:$0xff]
      %v387 = vld [vmem:[%s202 + $0x520] sm:$0xff]
      %v388 = vld [vmem:[%s202 + $0x528] sm:$0xff]
      %v389 = vld [vmem:[%s202 + $0x530] sm:$0xff]
      %v390 = vld [vmem:[%s202 + $0x538] sm:$0xff]
      %v391 = vld [vmem:[%s202 + $0x540] sm:$0xff]
      %v392 = vld [vmem:[%s202 + $0x548] sm:$0xff]
      %v393 = vld [vmem:[%s202 + $0x550] sm:$0xff]
      %v394 = vld [vmem:[%s202 + $0x558] sm:$0xff]
      %v395 = vld [vmem:[%s202 + $0x560] sm:$0xff]
      %v396 = vld [vmem:[%s202 + $0x568] sm:$0xff]
      %v397 = vld [vmem:[%s202 + $0x570] sm:$0xff]
      %v398 = vld [vmem:[%s202 + $0x578] sm:$0xff]
      %v399 = vld [vmem:[%s202 + $0x580] sm:$0xff]
      %v400 = vld [vmem:[%s202 + $0x588] sm:$0xff]
      %v401 = vld [vmem:[%s202 + $0x590] sm:$0xff]
      %v402 = vld [vmem:[%s202 + $0x598] sm:$0xff]
      %v403 = vld [vmem:[%s202 + $0x5a0] sm:$0xff]
      %v404 = vld [vmem:[%s202 + $0x5a8] sm:$0xff]
      %v405 = vld [vmem:[%s202 + $0x5b0] sm:$0xff]
      %v406 = vld [vmem:[%s202 + $0x5b8] sm:$0xff]
      %v407 = vld [vmem:[%s202 + $0x5c0] sm:$0xff]
      %v408 = vld [vmem:[%s202 + $0x5c8] sm:$0xff]
      %v409 = vld [vmem:[%s202 + $0x5d0] sm:$0xff]
      %v410 = vld [vmem:[%s202 + $0x5d8] sm:$0xff]
      %v411 = vld [vmem:[%s202 + $0x5e0] sm:$0xff]
      %v412 = vld [vmem:[%s202 + $0x5e8] sm:$0xff]
      %v413 = vld [vmem:[%s202 + $0x5f0] sm:$0xff]
      %v414 = vld [vmem:[%s202 + $0x5f8] sm:$0xff]
      %v415 = vld [vmem:[%s202 + $0x600] sm:$0xff]
      %v416 = vld [vmem:[%s202 + $0x608] sm:$0xff]
      %v417 = vld [vmem:[%s202 + $0x610] sm:$0xff]
      %v418 = vld [vmem:[%s202 + $0x618] sm:$0xff]
      %v419 = vld [vmem:[%s202 + $0x620] sm:$0xff]
      %v420 = vld [vmem:[%s202 + $0x628] sm:$0xff]
      %v421 = vld [vmem:[%s202 + $0x630] sm:$0xff]
      %v422 = vld [vmem:[%s202 + $0x638] sm:$0xff]
      %v423 = vadd.f32 %v223, %v224
      %v424 = vadd.f32 %v423, %v225
      %v425 = vadd.f32 %v424, %v226
      %v426 = vadd.f32 %v425, %v227
      %v427 = vadd.f32 %v426, %v228
      %v428 = vadd.f32 %v427, %v229
      %v429 = vadd.f32 %v428, %v230
      %v430 = vadd.f32 %v429, %v231
      %v431 = vadd.f32 %v430, %v232
      %v432 = vadd.f32 %v431, %v233
      %v433 = vadd.f32 %v432, %v234
      %v434 = vadd.f32 %v433, %v235
      %v435 = vadd.f32 %v434, %v236
      %v436 = vadd.f32 %v435, %v237
      %v437 = vadd.f32 %v436, %v238
      %v438 = vadd.f32 %v437, %v239
      %v439 = vadd.f32 %v438, %v240
      %v440 = vadd.f32 %v439, %v241
      %v441 = vadd.f32 %v440, %v242
      %v442 = vadd.f32 %v441, %v243
      %v443 = vadd.f32 %v442, %v244
      %v444 = vadd.f32 %v443, %v245
      %v445 = vadd.f32 %v444, %v246
      %vm446 = vcmask 523264
      %v447 = vsel %vm446, %v247, 0.0
      %v448 = vadd.f32 %v445, %v447
      %449 = vadd.xlane.f32.xlu0 %v448
      %v450 = vpop.xlane.xlu0 %449
      %v451 = vadd.f32 %v248, %v249
      %v452 = vadd.f32 %v451, %v250
      %v453 = vadd.f32 %v452, %v251
      %v454 = vadd.f32 %v453, %v252
      %v455 = vadd.f32 %v454, %v253
      %v456 = vadd.f32 %v455, %v254
      %v457 = vadd.f32 %v456, %v255
      %v458 = vadd.f32 %v457, %v256
      %v459 = vadd.f32 %v458, %v257
      %v460 = vadd.f32 %v459, %v258
      %v461 = vadd.f32 %v460, %v259
      %v462 = vadd.f32 %v461, %v260
      %v463 = vadd.f32 %v462, %v261
      %v464 = vadd.f32 %v463, %v262
      %v465 = vadd.f32 %v464, %v263
      %v466 = vadd.f32 %v465, %v264
      %v467 = vadd.f32 %v466, %v265
      %v468 = vadd.f32 %v467, %v266
      %v469 = vadd.f32 %v468, %v267
      %v470 = vadd.f32 %v469, %v268
      %v471 = vadd.f32 %v470, %v269
      %v472 = vadd.f32 %v471, %v270
      %v473 = vadd.f32 %v472, %v271
      %v474 = vsel %vm446, %v272, 0.0
      %v475 = vadd.f32 %v473, %v474
      %476 = vadd.xlane.f32.xlu0 %v475
      %v477 = vpop.xlane.xlu0 %476
      %v478 = vadd.f32 %v273, %v274
      %v479 = vadd.f32 %v478, %v275
      %v480 = vadd.f32 %v479, %v276
      %v481 = vadd.f32 %v480, %v277
      %v482 = vadd.f32 %v481, %v278
      %v483 = vadd.f32 %v482, %v279
      %v484 = vadd.f32 %v483, %v280
      %v485 = vadd.f32 %v484, %v281
      %v486 = vadd.f32 %v485, %v282
      %v487 = vadd.f32 %v486, %v283
      %v488 = vadd.f32 %v487, %v284
      %v489 = vadd.f32 %v488, %v285
      %v490 = vadd.f32 %v489, %v286
      %v491 = vadd.f32 %v490, %v287
      %v492 = vadd.f32 %v491, %v288
      %v493 = vadd.f32 %v492, %v289
      %v494 = vadd.f32 %v493, %v290
      %v495 = vadd.f32 %v494, %v291
      %v496 = vadd.f32 %v495, %v292
      %v497 = vadd.f32 %v496, %v293
      %v498 = vadd.f32 %v497, %v294
      %v499 = vadd.f32 %v498, %v295
      %v500 = vadd.f32 %v499, %v296
      %v501 = vsel %vm446, %v297, 0.0
      %v502 = vadd.f32 %v500, %v501
      %503 = vadd.xlane.f32.xlu0 %v502
      %v504 = vpop.xlane.xlu0 %503
      %v505 = vadd.f32 %v298, %v299
      %v506 = vadd.f32 %v505, %v300
      %v507 = vadd.f32 %v506, %v301
      %v508 = vadd.f32 %v507, %v302
      %v509 = vadd.f32 %v508, %v303
      %v510 = vadd.f32 %v509, %v304
      %v511 = vadd.f32 %v510, %v305
      %v512 = vadd.f32 %v511, %v306
      %v513 = vadd.f32 %v512, %v307
      %v514 = vadd.f32 %v513, %v308
      %v515 = vadd.f32 %v514, %v309
      %v516 = vadd.f32 %v515, %v310
      %v517 = vadd.f32 %v516, %v311
      %v518 = vadd.f32 %v517, %v312
      %v519 = vadd.f32 %v518, %v313
      %v520 = vadd.f32 %v519, %v314
      %v521 = vadd.f32 %v520, %v315
      %v522 = vadd.f32 %v521, %v316
      %v523 = vadd.f32 %v522, %v317
      %v524 = vadd.f32 %v523, %v318
      %v525 = vadd.f32 %v524, %v319
      %v526 = vadd.f32 %v525, %v320
      %v527 = vadd.f32 %v526, %v321
      %v528 = vsel %vm446, %v322, 0.0
      %v529 = vadd.f32 %v527, %v528
      %530 = vadd.xlane.f32.xlu0 %v529
      %v531 = vpop.xlane.xlu0 %530
      %v532 = vadd.f32 %v323, %v324
      %v533 = vadd.f32 %v532, %v325
      %v534 = vadd.f32 %v533, %v326
      %v535 = vadd.f32 %v534, %v327
      %v536 = vadd.f32 %v535, %v328
      %v537 = vadd.f32 %v536, %v329
      %v538 = vadd.f32 %v537, %v330
      %v539 = vadd.f32 %v538, %v331
      %v540 = vadd.f32 %v539, %v332
      %v541 = vadd.f32 %v540, %v333
      %v542 = vadd.f32 %v541, %v334
      %v543 = vadd.f32 %v542, %v335
      %v544 = vadd.f32 %v543, %v336
      %v545 = vadd.f32 %v544, %v337
      %v546 = vadd.f32 %v545, %v338
      %v547 = vadd.f32 %v546, %v339
      %v548 = vadd.f32 %v547, %v340
      %v549 = vadd.f32 %v548, %v341
      %v550 = vadd.f32 %v549, %v342
      %v551 = vadd.f32 %v550, %v343
      %v552 = vadd.f32 %v551, %v344
      %v553 = vadd.f32 %v552, %v345
      %v554 = vadd.f32 %v553, %v346
      %v555 = vsel %vm446, %v347, 0.0
      %v556 = vadd.f32 %v554, %v555
      %557 = vadd.xlane.f32.xlu0 %v556
      %v558 = vpop.xlane.xlu0 %557
      %v559 = vadd.f32 %v348, %v349
      %v560 = vadd.f32 %v559, %v350
      %v561 = vadd.f32 %v560, %v351
      %v562 = vadd.f32 %v561, %v352
      %v563 = vadd.f32 %v562, %v353
      %v564 = vadd.f32 %v563, %v354
      %v565 = vadd.f32 %v564, %v355
      %v566 = vadd.f32 %v565, %v356
      %v567 = vadd.f32 %v566, %v357
      %v568 = vadd.f32 %v567, %v358
      %v569 = vadd.f32 %v568, %v359
      %v570 = vadd.f32 %v569, %v360
      %v571 = vadd.f32 %v570, %v361
      %v572 = vadd.f32 %v571, %v362
      %v573 = vadd.f32 %v572, %v363
      %v574 = vadd.f32 %v573, %v364
      %v575 = vadd.f32 %v574, %v365
      %v576 = vadd.f32 %v575, %v366
      %v577 = vadd.f32 %v576, %v367
      %v578 = vadd.f32 %v577, %v368
      %v579 = vadd.f32 %v578, %v369
      %v580 = vadd.f32 %v579, %v370
      %v581 = vadd.f32 %v580, %v371
      %v582 = vsel %vm446, %v372, 0.0
      %v583 = vadd.f32 %v581, %v582
      %584 = vadd.xlane.f32.xlu0 %v583
      %v585 = vpop.xlane.xlu0 %584
      %v586 = vadd.f32 %v373, %v374
      %v587 = vadd.f32 %v586, %v375
      %v588 = vadd.f32 %v587, %v376
      %v589 = vadd.f32 %v588, %v377
      %v590 = vadd.f32 %v589, %v378
      %v591 = vadd.f32 %v590, %v379
      %v592 = vadd.f32 %v591, %v380
      %v593 = vadd.f32 %v592, %v381
      %v594 = vadd.f32 %v593, %v382
      %v595 = vadd.f32 %v594, %v383
      %v596 = vadd.f32 %v595, %v384
      %v597 = vadd.f32 %v596, %v385
      %v598 = vadd.f32 %v597, %v386
      %v599 = vadd.f32 %v598, %v387
      %v600 = vadd.f32 %v599, %v388
      %v601 = vadd.f32 %v600, %v389
      %v602 = vadd.f32 %v601, %v390
      %v603 = vadd.f32 %v602, %v391
      %v604 = vadd.f32 %v603, %v392
      %v605 = vadd.f32 %v604, %v393
      %v606 = vadd.f32 %v605, %v394
      %v607 = vadd.f32 %v606, %v395
      %v608 = vadd.f32 %v607, %v396
      %v609 = vsel %vm446, %v397, 0.0
      %v610 = vadd.f32 %v608, %v609
      %611 = vadd.xlane.f32.xlu0 %v610
      %v612 = vpop.xlane.xlu0 %611
      %v613 = vadd.f32 %v398, %v399
      %v614 = vadd.f32 %v613, %v400
      %v615 = vadd.f32 %v614, %v401
      %v616 = vadd.f32 %v615, %v402
      %v617 = vadd.f32 %v616, %v403
      %v618 = vadd.f32 %v617, %v404
      %v619 = vadd.f32 %v618, %v405
      %v620 = vadd.f32 %v619, %v406
      %v621 = vadd.f32 %v620, %v407
      %v622 = vadd.f32 %v621, %v408
      %v623 = vadd.f32 %v622, %v409
      %v624 = vadd.f32 %v623, %v410
      %v625 = vadd.f32 %v624, %v411
      %v626 = vadd.f32 %v625, %v412
      %v627 = vadd.f32 %v626, %v413
      %v628 = vadd.f32 %v627, %v414
      %v629 = vadd.f32 %v628, %v415
      %v630 = vadd.f32 %v629, %v416
      %v631 = vadd.f32 %v630, %v417
      %v632 = vadd.f32 %v631, %v418
      %v633 = vadd.f32 %v632, %v419
      %v634 = vadd.f32 %v633, %v420
      %v635 = vadd.f32 %v634, %v421
      %v636 = vsel %vm446, %v422, 0.0
      %v637 = vadd.f32 %v635, %v636
      %638 = vadd.xlane.f32.xlu0 %v637
      %v639 = vpop.xlane.xlu0 %638
      %v640 = vmul.f32 %v450, 0.00031887754
      %v641 = vmul.f32 %v477, 0.00031887754
      %v642 = vmul.f32 %v504, 0.00031887754
      %v643 = vmul.f32 %v531, 0.00031887754
      %v644 = vmul.f32 %v558, 0.00031887754
      %v645 = vmul.f32 %v585, 0.00031887754
      %v646 = vmul.f32 %v612, 0.00031887754
      %v647 = vmul.f32 %v639, 0.00031887754
      %v648 = vsub.f32 %v223, %v640
      %v649 = vsub.f32 %v224, %v640
      %v650 = vsub.f32 %v225, %v640
      %v651 = vsub.f32 %v226, %v640
      %v652 = vsub.f32 %v227, %v640
      %v653 = vsub.f32 %v228, %v640
      %v654 = vsub.f32 %v229, %v640
      %v655 = vsub.f32 %v230, %v640
      %v656 = vsub.f32 %v231, %v640
      %v657 = vsub.f32 %v232, %v640
      %v658 = vsub.f32 %v233, %v640
      %v659 = vsub.f32 %v234, %v640
      %v660 = vsub.f32 %v235, %v640
      %v661 = vsub.f32 %v236, %v640
      %v662 = vsub.f32 %v237, %v640
      %v663 = vsub.f32 %v238, %v640
      %v664 = vsub.f32 %v239, %v640
      %v665 = vsub.f32 %v240, %v640
      %v666 = vsub.f32 %v241, %v640
      %v667 = vsub.f32 %v242, %v640
      %v668 = vsub.f32 %v243, %v640
      %v669 = vsub.f32 %v244, %v640
      %v670 = vsub.f32 %v245, %v640
      %v671 = vsub.f32 %v246, %v640
      %v672 = vsub.f32 %v247, %v640
      %v673 = vsub.f32 %v248, %v641
      %v674 = vsub.f32 %v249, %v641
      %v675 = vsub.f32 %v250, %v641
      %v676 = vsub.f32 %v251, %v641
      %v677 = vsub.f32 %v252, %v641
      %v678 = vsub.f32 %v253, %v641
      %v679 = vsub.f32 %v254, %v641
      %v680 = vsub.f32 %v255, %v641
      %v681 = vsub.f32 %v256, %v641
      %v682 = vsub.f32 %v257, %v641
      %v683 = vsub.f32 %v258, %v641
      %v684 = vsub.f32 %v259, %v641
      %v685 = vsub.f32 %v260, %v641
      %v686 = vsub.f32 %v261, %v641
      %v687 = vsub.f32 %v262, %v641
      %v688 = vsub.f32 %v263, %v641
      %v689 = vsub.f32 %v264, %v641
      %v690 = vsub.f32 %v265, %v641
      %v691 = vsub.f32 %v266, %v641
      %v692 = vsub.f32 %v267, %v641
      %v693 = vsub.f32 %v268, %v641
      %v694 = vsub.f32 %v269, %v641
      %v695 = vsub.f32 %v270, %v641
      %v696 = vsub.f32 %v271, %v641
      %v697 = vsub.f32 %v272, %v641
      %v698 = vsub.f32 %v273, %v642
      %v699 = vsub.f32 %v274, %v642
      %v700 = vsub.f32 %v275, %v642
      %v701 = vsub.f32 %v276, %v642
      %v702 = vsub.f32 %v277, %v642
      %v703 = vsub.f32 %v278, %v642
      %v704 = vsub.f32 %v279, %v642
      %v705 = vsub.f32 %v280, %v642
      %v706 = vsub.f32 %v281, %v642
      %v707 = vsub.f32 %v282, %v642
      %v708 = vsub.f32 %v283, %v642
      %v709 = vsub.f32 %v284, %v642
      %v710 = vsub.f32 %v285, %v642
      %v711 = vsub.f32 %v286, %v642
      %v712 = vsub.f32 %v287, %v642
      %v713 = vsub.f32 %v288, %v642
      %v714 = vsub.f32 %v289, %v642
      %v715 = vsub.f32 %v290, %v642
      %v716 = vsub.f32 %v291, %v642
      %v717 = vsub.f32 %v292, %v642
      %v718 = vsub.f32 %v293, %v642
      %v719 = vsub.f32 %v294, %v642
      %v720 = vsub.f32 %v295, %v642
      %v721 = vsub.f32 %v296, %v642
      %v722 = vsub.f32 %v297, %v642
      %v723 = vsub.f32 %v298, %v643
      %v724 = vsub.f32 %v299, %v643
      %v725 = vsub.f32 %v300, %v643
      %v726 = vsub.f32 %v301, %v643
      %v727 = vsub.f32 %v302, %v643
      %v728 = vsub.f32 %v303, %v643
      %v729 = vsub.f32 %v304, %v643
      %v730 = vsub.f32 %v305, %v643
      %v731 = vsub.f32 %v306, %v643
      %v732 = vsub.f32 %v307, %v643
      %v733 = vsub.f32 %v308, %v643
      %v734 = vsub.f32 %v309, %v643
      %v735 = vsub.f32 %v310, %v643
      %v736 = vsub.f32 %v311, %v643
      %v737 = vsub.f32 %v312, %v643
      %v738 = vsub.f32 %v313, %v643
      %v739 = vsub.f32 %v314, %v643
      %v740 = vsub.f32 %v315, %v643
      %v741 = vsub.f32 %v316, %v643
      %v742 = vsub.f32 %v317, %v643
      %v743 = vsub.f32 %v318, %v643
      %v744 = vsub.f32 %v319, %v643
      %v745 = vsub.f32 %v320, %v643
      %v746 = vsub.f32 %v321, %v643
      %v747 = vsub.f32 %v322, %v643
      %v748 = vsub.f32 %v323, %v644
      %v749 = vsub.f32 %v324, %v644
      %v750 = vsub.f32 %v325, %v644
      %v751 = vsub.f32 %v326, %v644
      %v752 = vsub.f32 %v327, %v644
      %v753 = vsub.f32 %v328, %v644
      %v754 = vsub.f32 %v329, %v644
      %v755 = vsub.f32 %v330, %v644
      %v756 = vsub.f32 %v331, %v644
      %v757 = vsub.f32 %v332, %v644
      %v758 = vsub.f32 %v333, %v644
      %v759 = vsub.f32 %v334, %v644
      %v760 = vsub.f32 %v335, %v644
      %v761 = vsub.f32 %v336, %v644
      %v762 = vsub.f32 %v337, %v644
      %v763 = vsub.f32 %v338, %v644
      %v764 = vsub.f32 %v339, %v644
      %v765 = vsub.f32 %v340, %v644
      %v766 = vsub.f32 %v341, %v644
      %v767 = vsub.f32 %v342, %v644
      %v768 = vsub.f32 %v343, %v644
      %v769 = vsub.f32 %v344, %v644
      %v770 = vsub.f32 %v345, %v644
      %v771 = vsub.f32 %v346, %v644
      %v772 = vsub.f32 %v347, %v644
      %v773 = vsub.f32 %v348, %v645
      %v774 = vsub.f32 %v349, %v645
      %v775 = vsub.f32 %v350, %v645
      %v776 = vsub.f32 %v351, %v645
      %v777 = vsub.f32 %v352, %v645
      %v778 = vsub.f32 %v353, %v645
      %v779 = vsub.f32 %v354, %v645
      %v780 = vsub.f32 %v355, %v645
      %v781 = vsub.f32 %v356, %v645
      %v782 = vsub.f32 %v357, %v645
      %v783 = vsub.f32 %v358, %v645
      %v784 = vsub.f32 %v359, %v645
      %v785 = vsub.f32 %v360, %v645
      %v786 = vsub.f32 %v361, %v645
      %v787 = vsub.f32 %v362, %v645
      %v788 = vsub.f32 %v363, %v645
      %v789 = vsub.f32 %v364, %v645
      %v790 = vsub.f32 %v365, %v645
      %v791 = vsub.f32 %v366, %v645
      %v792 = vsub.f32 %v367, %v645
      %v793 = vsub.f32 %v368, %v645
      %v794 = vsub.f32 %v369, %v645
      %v795 = vsub.f32 %v370, %v645
      %v796 = vsub.f32 %v371, %v645
      %v797 = vsub.f32 %v372, %v645
      %v798 = vsub.f32 %v373, %v646
      %v799 = vsub.f32 %v374, %v646
      %v800 = vsub.f32 %v375, %v646
      %v801 = vsub.f32 %v376, %v646
      %v802 = vsub.f32 %v377, %v646
      %v803 = vsub.f32 %v378, %v646
      %v804 = vsub.f32 %v379, %v646
      %v805 = vsub.f32 %v380, %v646
      %v806 = vsub.f32 %v381, %v646
      %v807 = vsub.f32 %v382, %v646
      %v808 = vsub.f32 %v383, %v646
      %v809 = vsub.f32 %v384, %v646
      %v810 = vsub.f32 %v385, %v646
      %v811 = vsub.f32 %v386, %v646
      %v812 = vsub.f32 %v387, %v646
      %v813 = vsub.f32 %v388, %v646
      %v814 = vsub.f32 %v389, %v646
      %v815 = vsub.f32 %v390, %v646
      %v816 = vsub.f32 %v391, %v646
      %v817 = vsub.f32 %v392, %v646
      %v818 = vsub.f32 %v393, %v646
      %v819 = vsub.f32 %v394, %v646
      %v820 = vsub.f32 %v395, %v646
      %v821 = vsub.f32 %v396, %v646
      %v822 = vsub.f32 %v397, %v646
      %v823 = vsub.f32 %v398, %v647
      %v824 = vsub.f32 %v399, %v647
      %v825 = vsub.f32 %v400, %v647
      %v826 = vsub.f32 %v401, %v647
      %v827 = vsub.f32 %v402, %v647
      %v828 = vsub.f32 %v403, %v647
      %v829 = vsub.f32 %v404, %v647
      %v830 = vsub.f32 %v405, %v647
      %v831 = vsub.f32 %v406, %v647
      %v832 = vsub.f32 %v407, %v647
      %v833 = vsub.f32 %v408, %v647
      %v834 = vsub.f32 %v409, %v647
      %v835 = vsub.f32 %v410, %v647
      %v836 = vsub.f32 %v411, %v647
      %v837 = vsub.f32 %v412, %v647
      %v838 = vsub.f32 %v413, %v647
      %v839 = vsub.f32 %v414, %v647
      %v840 = vsub.f32 %v415, %v647
      %v841 = vsub.f32 %v416, %v647
      %v842 = vsub.f32 %v417, %v647
      %v843 = vsub.f32 %v418, %v647
      %v844 = vsub.f32 %v419, %v647
      %v845 = vsub.f32 %v420, %v647
      %v846 = vsub.f32 %v421, %v647
      %v847 = vsub.f32 %v422, %v647
      %v848 = vmul.f32 %v648, %v648
      %v849 = vmul.f32 %v649, %v649
      %v850 = vmul.f32 %v650, %v650
      %v851 = vmul.f32 %v651, %v651
      %v852 = vmul.f32 %v652, %v652
      %v853 = vmul.f32 %v653, %v653
      %v854 = vmul.f32 %v654, %v654
      %v855 = vmul.f32 %v655, %v655
      %v856 = vmul.f32 %v656, %v656
      %v857 = vmul.f32 %v657, %v657
      %v858 = vmul.f32 %v658, %v658
      %v859 = vmul.f32 %v659, %v659
      %v860 = vmul.f32 %v660, %v660
      %v861 = vmul.f32 %v661, %v661
      %v862 = vmul.f32 %v662, %v662
      %v863 = vmul.f32 %v663, %v663
      %v864 = vmul.f32 %v664, %v664
      %v865 = vmul.f32 %v665, %v665
      %v866 = vmul.f32 %v666, %v666
      %v867 = vmul.f32 %v667, %v667
      %v868 = vmul.f32 %v668, %v668
      %v869 = vmul.f32 %v669, %v669
      %v870 = vmul.f32 %v670, %v670
      %v871 = vmul.f32 %v671, %v671
      %v872 = vmul.f32 %v672, %v672
      %v873 = vmul.f32 %v673, %v673
      %v874 = vmul.f32 %v674, %v674
      %v875 = vmul.f32 %v675, %v675
      %v876 = vmul.f32 %v676, %v676
      %v877 = vmul.f32 %v677, %v677
      %v878 = vmul.f32 %v678, %v678
      %v879 = vmul.f32 %v679, %v679
      %v880 = vmul.f32 %v680, %v680
      %v881 = vmul.f32 %v681, %v681
      %v882 = vmul.f32 %v682, %v682
      %v883 = vmul.f32 %v683, %v683
      %v884 = vmul.f32 %v684, %v684
      %v885 = vmul.f32 %v685, %v685
      %v886 = vmul.f32 %v686, %v686
      %v887 = vmul.f32 %v687, %v687
      %v888 = vmul.f32 %v688, %v688
      %v889 = vmul.f32 %v689, %v689
      %v890 = vmul.f32 %v690, %v690
      %v891 = vmul.f32 %v691, %v691
      %v892 = vmul.f32 %v692, %v692
      %v893 = vmul.f32 %v693, %v693
      %v894 = vmul.f32 %v694, %v694
      %v895 = vmul.f32 %v695, %v695
      %v896 = vmul.f32 %v696, %v696
      %v897 = vmul.f32 %v697, %v697
      %v898 = vmul.f32 %v698, %v698
      %v899 = vmul.f32 %v699, %v699
      %v900 = vmul.f32 %v700, %v700
      %v901 = vmul.f32 %v701, %v701
      %v902 = vmul.f32 %v702, %v702
      %v903 = vmul.f32 %v703, %v703
      %v904 = vmul.f32 %v704, %v704
      %v905 = vmul.f32 %v705, %v705
      %v906 = vmul.f32 %v706, %v706
      %v907 = vmul.f32 %v707, %v707
      %v908 = vmul.f32 %v708, %v708
      %v909 = vmul.f32 %v709, %v709
      %v910 = vmul.f32 %v710, %v710
      %v911 = vmul.f32 %v711, %v711
      %v912 = vmul.f32 %v712, %v712
      %v913 = vmul.f32 %v713, %v713
      %v914 = vmul.f32 %v714, %v714
      %v915 = vmul.f32 %v715, %v715
      %v916 = vmul.f32 %v716, %v716
      %v917 = vmul.f32 %v717, %v717
      %v918 = vmul.f32 %v718, %v718
      %v919 = vmul.f32 %v719, %v719
      %v920 = vmul.f32 %v720, %v720
      %v921 = vmul.f32 %v721, %v721
      %v922 = vmul.f32 %v722, %v722
      %v923 = vmul.f32 %v723, %v723
      %v924 = vmul.f32 %v724, %v724
      %v925 = vmul.f32 %v725, %v725
      %v926 = vmul.f32 %v726, %v726
      %v927 = vmul.f32 %v727, %v727
      %v928 = vmul.f32 %v728, %v728
      %v929 = vmul.f32 %v729, %v729
      %v930 = vmul.f32 %v730, %v730
      %v931 = vmul.f32 %v731, %v731
      %v932 = vmul.f32 %v732, %v732
      %v933 = vmul.f32 %v733, %v733
      %v934 = vmul.f32 %v734, %v734
      %v935 = vmul.f32 %v735, %v735
      %v936 = vmul.f32 %v736, %v736
      %v937 = vmul.f32 %v737, %v737
      %v938 = vmul.f32 %v738, %v738
      %v939 = vmul.f32 %v739, %v739
      %v940 = vmul.f32 %v740, %v740
      %v941 = vmul.f32 %v741, %v741
      %v942 = vmul.f32 %v742, %v742
      %v943 = vmul.f32 %v743, %v743
      %v944 = vmul.f32 %v744, %v744
      %v945 = vmul.f32 %v745, %v745
      %v946 = vmul.f32 %v746, %v746
      %v947 = vmul.f32 %v747, %v747
      %v948 = vmul.f32 %v748, %v748
      %v949 = vmul.f32 %v749, %v749
      %v950 = vmul.f32 %v750, %v750
      %v951 = vmul.f32 %v751, %v751
      %v952 = vmul.f32 %v752, %v752
      %v953 = vmul.f32 %v753, %v753
      %v954 = vmul.f32 %v754, %v754
      %v955 = vmul.f32 %v755, %v755
      %v956 = vmul.f32 %v756, %v756
      %v957 = vmul.f32 %v757, %v757
      %v958 = vmul.f32 %v758, %v758
      %v959 = vmul.f32 %v759, %v759
      %v960 = vmul.f32 %v760, %v760
      %v961 = vmul.f32 %v761, %v761
      %v962 = vmul.f32 %v762, %v762
      %v963 = vmul.f32 %v763, %v763
      %v964 = vmul.f32 %v764, %v764
      %v965 = vmul.f32 %v765, %v765
      %v966 = vmul.f32 %v766, %v766
      %v967 = vmul.f32 %v767, %v767
      %v968 = vmul.f32 %v768, %v768
      %v969 = vmul.f32 %v769, %v769
      %v970 = vmul.f32 %v770, %v770
      %v971 = vmul.f32 %v771, %v771
      %v972 = vmul.f32 %v772, %v772
      %v973 = vmul.f32 %v773, %v773
      %v974 = vmul.f32 %v774, %v774
      %v975 = vmul.f32 %v775, %v775
      %v976 = vmul.f32 %v776, %v776
      %v977 = vmul.f32 %v777, %v777
      %v978 = vmul.f32 %v778, %v778
      %v979 = vmul.f32 %v779, %v779
      %v980 = vmul.f32 %v780, %v780
      %v981 = vmul.f32 %v781, %v781
      %v982 = vmul.f32 %v782, %v782
      %v983 = vmul.f32 %v783, %v783
      %v984 = vmul.f32 %v784, %v784
      %v985 = vmul.f32 %v785, %v785
      %v986 = vmul.f32 %v786, %v786
      %v987 = vmul.f32 %v787, %v787
      %v988 = vmul.f32 %v788, %v788
      %v989 = vmul.f32 %v789, %v789
      %v990 = vmul.f32 %v790, %v790
      %v991 = vmul.f32 %v791, %v791
      %v992 = vmul.f32 %v792, %v792
      %v993 = vmul.f32 %v793, %v793
      %v994 = vmul.f32 %v794, %v794
      %v995 = vmul.f32 %v795, %v795
      %v996 = vmul.f32 %v796, %v796
      %v997 = vmul.f32 %v797, %v797
      %v998 = vmul.f32 %v798, %v798
      %v999 = vmul.f32 %v799, %v799
      %v1000 = vmul.f32 %v800, %v800
      %v1001 = vmul.f32 %v801, %v801
      %v1002 = vmul.f32 %v802, %v802
      %v1003 = vmul.f32 %v803, %v803
      %v1004 = vmul.f32 %v804, %v804
      %v1005 = vmul.f32 %v805, %v805
      %v1006 = vmul.f32 %v806, %v806
      %v1007 = vmul.f32 %v807, %v807
      %v1008 = vmul.f32 %v808, %v808
      %v1009 = vmul.f32 %v809, %v809
      %v1010 = vmul.f32 %v810, %v810
      %v1011 = vmul.f32 %v811, %v811
      %v1012 = vmul.f32 %v812, %v812
      %v1013 = vmul.f32 %v813, %v813
      %v1014 = vmul.f32 %v814, %v814
      %v1015 = vmul.f32 %v815, %v815
      %v1016 = vmul.f32 %v816, %v816
      %v1017 = vmul.f32 %v817, %v817
      %v1018 = vmul.f32 %v818, %v818
      %v1019 = vmul.f32 %v819, %v819
      %v1020 = vmul.f32 %v820, %v820
      %v1021 = vmul.f32 %v821, %v821
      %v1022 = vmul.f32 %v822, %v822
      %v1023 = vmul.f32 %v823, %v823
      %v1024 = vmul.f32 %v824, %v824
      %v1025 = vmul.f32 %v825, %v825
      %v1026 = vmul.f32 %v826, %v826
      %v1027 = vmul.f32 %v827, %v827
      %v1028 = vmul.f32 %v828, %v828
      %v1029 = vmul.f32 %v829, %v829
      %v1030 = vmul.f32 %v830, %v830
      %v1031 = vmul.f32 %v831, %v831
      %v1032 = vmul.f32 %v832, %v832
      %v1033 = vmul.f32 %v833, %v833
      %v1034 = vmul.f32 %v834, %v834
      %v1035 = vmul.f32 %v835, %v835
      %v1036 = vmul.f32 %v836, %v836
      %v1037 = vmul.f32 %v837, %v837
      %v1038 = vmul.f32 %v838, %v838
      %v1039 = vmul.f32 %v839, %v839
      %v1040 = vmul.f32 %v840, %v840
      %v1041 = vmul.f32 %v841, %v841
      %v1042 = vmul.f32 %v842, %v842
      %v1043 = vmul.f32 %v843, %v843
      %v1044 = vmul.f32 %v844, %v844
      %v1045 = vmul.f32 %v845, %v845
      %v1046 = vmul.f32 %v846, %v846
      %v1047 = vmul.f32 %v847, %v847
      %v1048 = vadd.f32 %v848, %v849
      %v1049 = vadd.f32 %v1048, %v850
      %v1050 = vadd.f32 %v1049, %v851
      %v1051 = vadd.f32 %v1050, %v852
      %v1052 = vadd.f32 %v1051, %v853
      %v1053 = vadd.f32 %v1052, %v854
      %v1054 = vadd.f32 %v1053, %v855
      %v1055 = vadd.f32 %v1054, %v856
      %v1056 = vadd.f32 %v1055, %v857
      %v1057 = vadd.f32 %v1056, %v858
      %v1058 = vadd.f32 %v1057, %v859
      %v1059 = vadd.f32 %v1058, %v860
      %v1060 = vadd.f32 %v1059, %v861
      %v1061 = vadd.f32 %v1060, %v862
      %v1062 = vadd.f32 %v1061, %v863
      %v1063 = vadd.f32 %v1062, %v864
      %v1064 = vadd.f32 %v1063, %v865
      %v1065 = vadd.f32 %v1064, %v866
      %v1066 = vadd.f32 %v1065, %v867
      %v1067 = vadd.f32 %v1066, %v868
      %v1068 = vadd.f32 %v1067, %v869
      %v1069 = vadd.f32 %v1068, %v870
      %v1070 = vadd.f32 %v1069, %v871
      %v1071 = vsel %vm446, %v872, 0.0
      %v1072 = vadd.f32 %v1070, %v1071
      %1073 = vadd.xlane.f32.xlu0 %v1072
      %v1074 = vpop.xlane.xlu0 %1073
      %v1075 = vadd.f32 %v873, %v874
      %v1076 = vadd.f32 %v1075, %v875
      %v1077 = vadd.f32 %v1076, %v876
      %v1078 = vadd.f32 %v1077, %v877
      %v1079 = vadd.f32 %v1078, %v878
      %v1080 = vadd.f32 %v1079, %v879
      %v1081 = vadd.f32 %v1080, %v880
      %v1082 = vadd.f32 %v1081, %v881
      %v1083 = vadd.f32 %v1082, %v882
      %v1084 = vadd.f32 %v1083, %v883
      %v1085 = vadd.f32 %v1084, %v884
      %v1086 = vadd.f32 %v1085, %v885
      %v1087 = vadd.f32 %v1086, %v886
      %v1088 = vadd.f32 %v1087, %v887
      %v1089 = vadd.f32 %v1088, %v888
      %v1090 = vadd.f32 %v1089, %v889
      %v1091 = vadd.f32 %v1090, %v890
      %v1092 = vadd.f32 %v1091, %v891
      %v1093 = vadd.f32 %v1092, %v892
      %v1094 = vadd.f32 %v1093, %v893
      %v1095 = vadd.f32 %v1094, %v894
      %v1096 = vadd.f32 %v1095, %v895
      %v1097 = vadd.f32 %v1096, %v896
      %v1098 = vsel %vm446, %v897, 0.0
      %v1099 = vadd.f32 %v1097, %v1098
      %1100 = vadd.xlane.f32.xlu0 %v1099
      %v1101 = vpop.xlane.xlu0 %1100
      %v1102 = vadd.f32 %v898, %v899
      %v1103 = vadd.f32 %v1102, %v900
      %v1104 = vadd.f32 %v1103, %v901
      %v1105 = vadd.f32 %v1104, %v902
      %v1106 = vadd.f32 %v1105, %v903
      %v1107 = vadd.f32 %v1106, %v904
      %v1108 = vadd.f32 %v1107, %v905
      %v1109 = vadd.f32 %v1108, %v906
      %v1110 = vadd.f32 %v1109, %v907
      %v1111 = vadd.f32 %v1110, %v908
      %v1112 = vadd.f32 %v1111, %v909
      %v1113 = vadd.f32 %v1112, %v910
      %v1114 = vadd.f32 %v1113, %v911
      %v1115 = vadd.f32 %v1114, %v912
      %v1116 = vadd.f32 %v1115, %v913
      %v1117 = vadd.f32 %v1116, %v914
      %v1118 = vadd.f32 %v1117, %v915
      %v1119 = vadd.f32 %v1118, %v916
      %v1120 = vadd.f32 %v1119, %v917
      %v1121 = vadd.f32 %v1120, %v918
      %v1122 = vadd.f32 %v1121, %v919
      %v1123 = vadd.f32 %v1122, %v920
      %v1124 = vadd.f32 %v1123, %v921
      %v1125 = vsel %vm446, %v922, 0.0
      %v1126 = vadd.f32 %v1124, %v1125
      %1127 = vadd.xlane.f32.xlu0 %v1126
      %v1128 = vpop.xlane.xlu0 %1127
      %v1129 = vadd.f32 %v923, %v924
      %v1130 = vadd.f32 %v1129, %v925
      %v1131 = vadd.f32 %v1130, %v926
      %v1132 = vadd.f32 %v1131, %v927
      %v1133 = vadd.f32 %v1132, %v928
      %v1134 = vadd.f32 %v1133, %v929
      %v1135 = vadd.f32 %v1134, %v930
      %v1136 = vadd.f32 %v1135, %v931
      %v1137 = vadd.f32 %v1136, %v932
      %v1138 = vadd.f32 %v1137, %v933
      %v1139 = vadd.f32 %v1138, %v934
      %v1140 = vadd.f32 %v1139, %v935
      %v1141 = vadd.f32 %v1140, %v936
      %v1142 = vadd.f32 %v1141, %v937
      %v1143 = vadd.f32 %v1142, %v938
      %v1144 = vadd.f32 %v1143, %v939
      %v1145 = vadd.f32 %v1144, %v940
      %v1146 = vadd.f32 %v1145, %v941
      %v1147 = vadd.f32 %v1146, %v942
      %v1148 = vadd.f32 %v1147, %v943
      %v1149 = vadd.f32 %v1148, %v944
      %v1150 = vadd.f32 %v1149, %v945
      %v1151 = vadd.f32 %v1150, %v946
      %v1152 = vsel %vm446, %v947, 0.0
      %v1153 = vadd.f32 %v1151, %v1152
      %1154 = vadd.xlane.f32.xlu0 %v1153
      %v1155 = vpop.xlane.xlu0 %1154
      %v1156 = vadd.f32 %v948, %v949
      %v1157 = vadd.f32 %v1156, %v950
      %v1158 = vadd.f32 %v1157, %v951
      %v1159 = vadd.f32 %v1158, %v952
      %v1160 = vadd.f32 %v1159, %v953
      %v1161 = vadd.f32 %v1160, %v954
      %v1162 = vadd.f32 %v1161, %v955
      %v1163 = vadd.f32 %v1162, %v956
      %v1164 = vadd.f32 %v1163, %v957
      %v1165 = vadd.f32 %v1164, %v958
      %v1166 = vadd.f32 %v1165, %v959
      %v1167 = vadd.f32 %v1166, %v960
      %v1168 = vadd.f32 %v1167, %v961
      %v1169 = vadd.f32 %v1168, %v962
      %v1170 = vadd.f32 %v1169, %v963
      %v1171 = vadd.f32 %v1170, %v964
      %v1172 = vadd.f32 %v1171, %v965
      %v1173 = vadd.f32 %v1172, %v966
      %v1174 = vadd.f32 %v1173, %v967
      %v1175 = vadd.f32 %v1174, %v968
      %v1176 = vadd.f32 %v1175, %v969
      %v1177 = vadd.f32 %v1176, %v970
      %v1178 = vadd.f32 %v1177, %v971
      %v1179 = vsel %vm446, %v972, 0.0
      %v1180 = vadd.f32 %v1178, %v1179
      %1181 = vadd.xlane.f32.xlu0 %v1180
      %v1182 = vpop.xlane.xlu0 %1181
      %v1183 = vadd.f32 %v973, %v974
      %v1184 = vadd.f32 %v1183, %v975
      %v1185 = vadd.f32 %v1184, %v976
      %v1186 = vadd.f32 %v1185, %v977
      %v1187 = vadd.f32 %v1186, %v978
      %v1188 = vadd.f32 %v1187, %v979
      %v1189 = vadd.f32 %v1188, %v980
      %v1190 = vadd.f32 %v1189, %v981
      %v1191 = vadd.f32 %v1190, %v982
      %v1192 = vadd.f32 %v1191, %v983
      %v1193 = vadd.f32 %v1192, %v984
      %v1194 = vadd.f32 %v1193, %v985
      %v1195 = vadd.f32 %v1194, %v986
      %v1196 = vadd.f32 %v1195, %v987
      %v1197 = vadd.f32 %v1196, %v988
      %v1198 = vadd.f32 %v1197, %v989
      %v1199 = vadd.f32 %v1198, %v990
      %v1200 = vadd.f32 %v1199, %v991
      %v1201 = vadd.f32 %v1200, %v992
      %v1202 = vadd.f32 %v1201, %v993
      %v1203 = vadd.f32 %v1202, %v994
      %v1204 = vadd.f32 %v1203, %v995
      %v1205 = vadd.f32 %v1204, %v996
      %v1206 = vsel %vm446, %v997, 0.0
      %v1207 = vadd.f32 %v1205, %v1206
      %1208 = vadd.xlane.f32.xlu0 %v1207
      %v1209 = vpop.xlane.xlu0 %1208
      %v1210 = vadd.f32 %v998, %v999
      %v1211 = vadd.f32 %v1210, %v1000
      %v1212 = vadd.f32 %v1211, %v1001
      %v1213 = vadd.f32 %v1212, %v1002
      %v1214 = vadd.f32 %v1213, %v1003
      %v1215 = vadd.f32 %v1214, %v1004
      %v1216 = vadd.f32 %v1215, %v1005
      %v1217 = vadd.f32 %v1216, %v1006
      %v1218 = vadd.f32 %v1217, %v1007
      %v1219 = vadd.f32 %v1218, %v1008
      %v1220 = vadd.f32 %v1219, %v1009
      %v1221 = vadd.f32 %v1220, %v1010
      %v1222 = vadd.f32 %v1221, %v1011
      %v1223 = vadd.f32 %v1222, %v1012
      %v1224 = vadd.f32 %v1223, %v1013
      %v1225 = vadd.f32 %v1224, %v1014
      %v1226 = vadd.f32 %v1225, %v1015
      %v1227 = vadd.f32 %v1226, %v1016
      %v1228 = vadd.f32 %v1227, %v1017
      %v1229 = vadd.f32 %v1228, %v1018
      %v1230 = vadd.f32 %v1229, %v1019
      %v1231 = vadd.f32 %v1230, %v1020
      %v1232 = vadd.f32 %v1231, %v1021
      %v1233 = vsel %vm446, %v1022, 0.0
      %v1234 = vadd.f32 %v1232, %v1233
      %1235 = vadd.xlane.f32.xlu0 %v1234
      %v1236 = vpop.xlane.xlu0 %1235
      %v1237 = vadd.f32 %v1023, %v1024
      %v1238 = vadd.f32 %v1237, %v1025
      %v1239 = vadd.f32 %v1238, %v1026
      %v1240 = vadd.f32 %v1239, %v1027
      %v1241 = vadd.f32 %v1240, %v1028
      %v1242 = vadd.f32 %v1241, %v1029
      %v1243 = vadd.f32 %v1242, %v1030
      %v1244 = vadd.f32 %v1243, %v1031
      %v1245 = vadd.f32 %v1244, %v1032
      %v1246 = vadd.f32 %v1245, %v1033
      %v1247 = vadd.f32 %v1246, %v1034
      %v1248 = vadd.f32 %v1247, %v1035
      %v1249 = vadd.f32 %v1248, %v1036
      %v1250 = vadd.f32 %v1249, %v1037
      %v1251 = vadd.f32 %v1250, %v1038
      %v1252 = vadd.f32 %v1251, %v1039
      %v1253 = vadd.f32 %v1252, %v1040
      %v1254 = vadd.f32 %v1253, %v1041
      %v1255 = vadd.f32 %v1254, %v1042
      %v1256 = vadd.f32 %v1255, %v1043
      %v1257 = vadd.f32 %v1256, %v1044
      %v1258 = vadd.f32 %v1257, %v1045
      %v1259 = vadd.f32 %v1258, %v1046
      %v1260 = vsel %vm446, %v1047, 0.0
      %v1261 = vadd.f32 %v1259, %v1260
      %1262 = vadd.xlane.f32.xlu0 %v1261
      %v1263 = vpop.xlane.xlu0 %1262
      %v1264 = vmul.f32 %v1074, 0.00031887754
      %v1265 = vmul.f32 %v1101, 0.00031887754
      %v1266 = vmul.f32 %v1128, 0.00031887754
      %v1267 = vmul.f32 %v1155, 0.00031887754
      %v1268 = vmul.f32 %v1182, 0.00031887754
      %v1269 = vmul.f32 %v1209, 0.00031887754
      %v1270 = vmul.f32 %v1236, 0.00031887754
      %v1271 = vmul.f32 %v1263, 0.00031887754
      %v1272 = vadd.f32 %v1264, 1e-05
      %v1273 = vadd.f32 %v1265, 1e-05
      %v1274 = vadd.f32 %v1266, 1e-05
      %v1275 = vadd.f32 %v1267, 1e-05
      %v1276 = vadd.f32 %v1268, 1e-05
      %v1277 = vadd.f32 %v1269, 1e-05
      %v1278 = vadd.f32 %v1270, 1e-05
      %v1279 = vadd.f32 %v1271, 1e-05
      %v1280 = vrsqrt.pop %v1272
      %v1281 = vrsqrt.pop %v1273
      %v1282 = vrsqrt.pop %v1274
      %v1283 = vrsqrt.pop %v1275
      %v1284 = vrsqrt.pop %v1276
      %v1285 = vrsqrt.pop %v1277
      %v1286 = vrsqrt.pop %v1278
      %v1287 = vrsqrt.pop %v1279
      %v1288 = vld [vmem:[%s208] sm:$0xff]
      %v1289 = vld [vmem:[%s208 + $0x8] sm:$0xff]
      %v1290 = vld [vmem:[%s208 + $0x10] sm:$0xff]
      %v1291 = vld [vmem:[%s208 + $0x18] sm:$0xff]
      %v1292 = vld [vmem:[%s208 + $0x20] sm:$0xff]
      %v1293 = vld [vmem:[%s208 + $0x28] sm:$0xff]
      %v1294 = vld [vmem:[%s208 + $0x30] sm:$0xff]
      %v1295 = vld [vmem:[%s208 + $0x38] sm:$0xff]
      %v1296 = vmul.f32 %v1288, %v1280
      %v1297 = vmul.f32 %v1289, %v1281
      %v1298 = vmul.f32 %v1290, %v1282
      %v1299 = vmul.f32 %v1291, %v1283
      %v1300 = vmul.f32 %v1292, %v1284
      %v1301 = vmul.f32 %v1293, %v1285
      %v1302 = vmul.f32 %v1294, %v1286
      %v1303 = vmul.f32 %v1295, %v1287
      %v1304 = vld [vmem:[%s214] sm:$0xff]
      %v1305 = vld [vmem:[%s214 + $0x8] sm:$0xff]
      %v1306 = vld [vmem:[%s214 + $0x10] sm:$0xff]
      %v1307 = vld [vmem:[%s214 + $0x18] sm:$0xff]
      %v1308 = vld [vmem:[%s214 + $0x20] sm:$0xff]
      %v1309 = vld [vmem:[%s214 + $0x28] sm:$0xff]
      %v1310 = vld [vmem:[%s214 + $0x30] sm:$0xff]
      %v1311 = vld [vmem:[%s214 + $0x38] sm:$0xff]
      %v1312 = vmul.f32 %v640, %v1296
      %v1313 = vmul.f32 %v641, %v1297
      %v1314 = vmul.f32 %v642, %v1298
      %v1315 = vmul.f32 %v643, %v1299
      %v1316 = vmul.f32 %v644, %v1300
      %v1317 = vmul.f32 %v645, %v1301
      %v1318 = vmul.f32 %v646, %v1302
      %v1319 = vmul.f32 %v647, %v1303
      %v1320 = vsub.f32 %v1304, %v1312
      %v1321 = vsub.f32 %v1305, %v1313
      %v1322 = vsub.f32 %v1306, %v1314
      %v1323 = vsub.f32 %v1307, %v1315
      %v1324 = vsub.f32 %v1308, %v1316
      %v1325 = vsub.f32 %v1309, %v1317
      %v1326 = vsub.f32 %v1310, %v1318
      %v1327 = vsub.f32 %v1311, %v1319
      %1329 = vset.pattern.permute.xlu0 0
      %1330 = vperm.xlu0 %1329, %v1296
      %v1331 = vpop.permute.xlu0 %1330
      %1334 = vset.pattern.permute.xlu0 0
      %1335 = vperm.xlu0 %1334, %v1297
      %v1336 = vpop.permute.xlu0 %1335
      %1339 = vset.pattern.permute.xlu0 0
      %1340 = vperm.xlu0 %1339, %v1298
      %v1341 = vpop.permute.xlu0 %1340
      %1344 = vset.pattern.permute.xlu0 0
      %1345 = vperm.xlu0 %1344, %v1299
      %v1346 = vpop.permute.xlu0 %1345
      %1349 = vset.pattern.permute.xlu0 0
      %1350 = vperm.xlu0 %1349, %v1300
      %v1351 = vpop.permute.xlu0 %1350
      %1354 = vset.pattern.permute.xlu0 0
      %1355 = vperm.xlu0 %1354, %v1301
      %v1356 = vpop.permute.xlu0 %1355
      %1359 = vset.pattern.permute.xlu0 0
      %1360 = vperm.xlu0 %1359, %v1302
      %v1361 = vpop.permute.xlu0 %1360
      %1364 = vset.pattern.permute.xlu0 0
      %1365 = vperm.xlu0 %1364, %v1303
      %v1366 = vpop.permute.xlu0 %1365
      %v1368 = vmul.f32 %v223, %v1331
      %v1369 = vmul.f32 %v224, %v1331
      %v1370 = vmul.f32 %v225, %v1331
      %v1371 = vmul.f32 %v226, %v1331
      %v1372 = vmul.f32 %v227, %v1331
      %v1373 = vmul.f32 %v228, %v1331
      %v1374 = vmul.f32 %v229, %v1331
      %v1375 = vmul.f32 %v230, %v1331
      %v1376 = vmul.f32 %v231, %v1331
      %v1377 = vmul.f32 %v232, %v1331
      %v1378 = vmul.f32 %v233, %v1331
      %v1379 = vmul.f32 %v234, %v1331
      %v1380 = vmul.f32 %v235, %v1331
      %v1381 = vmul.f32 %v236, %v1331
      %v1382 = vmul.f32 %v237, %v1331
      %v1383 = vmul.f32 %v238, %v1331
      %v1384 = vmul.f32 %v239, %v1331
      %v1385 = vmul.f32 %v240, %v1331
      %v1386 = vmul.f32 %v241, %v1331
      %v1387 = vmul.f32 %v242, %v1331
      %v1388 = vmul.f32 %v243, %v1331
      %v1389 = vmul.f32 %v244, %v1331
      %v1390 = vmul.f32 %v245, %v1331
      %v1391 = vmul.f32 %v246, %v1331
      %v1392 = vmul.f32 %v247, %v1331
      %v1393 = vmul.f32 %v248, %v1336
      %v1394 = vmul.f32 %v249, %v1336
      %v1395 = vmul.f32 %v250, %v1336
      %v1396 = vmul.f32 %v251, %v1336
      %v1397 = vmul.f32 %v252, %v1336
      %v1398 = vmul.f32 %v253, %v1336
      %v1399 = vmul.f32 %v254, %v1336
      %v1400 = vmul.f32 %v255, %v1336
      %v1401 = vmul.f32 %v256, %v1336
      %v1402 = vmul.f32 %v257, %v1336
      %v1403 = vmul.f32 %v258, %v1336
      %v1404 = vmul.f32 %v259, %v1336
      %v1405 = vmul.f32 %v260, %v1336
      %v1406 = vmul.f32 %v261, %v1336
      %v1407 = vmul.f32 %v262, %v1336
      %v1408 = vmul.f32 %v263, %v1336
      %v1409 = vmul.f32 %v264, %v1336
      %v1410 = vmul.f32 %v265, %v1336
      %v1411 = vmul.f32 %v266, %v1336
      %v1412 = vmul.f32 %v267, %v1336
      %v1413 = vmul.f32 %v268, %v1336
      %v1414 = vmul.f32 %v269, %v1336
      %v1415 = vmul.f32 %v270, %v1336
      %v1416 = vmul.f32 %v271, %v1336
      %v1417 = vmul.f32 %v272, %v1336
      %v1418 = vmul.f32 %v273, %v1341
      %v1419 = vmul.f32 %v274, %v1341
      %v1420 = vmul.f32 %v275, %v1341
      %v1421 = vmul.f32 %v276, %v1341
      %v1422 = vmul.f32 %v277, %v1341
      %v1423 = vmul.f32 %v278, %v1341
      %v1424 = vmul.f32 %v279, %v1341
      %v1425 = vmul.f32 %v280, %v1341
      %v1426 = vmul.f32 %v281, %v1341
      %v1427 = vmul.f32 %v282, %v1341
      %v1428 = vmul.f32 %v283, %v1341
      %v1429 = vmul.f32 %v284, %v1341
      %v1430 = vmul.f32 %v285, %v1341
      %v1431 = vmul.f32 %v286, %v1341
      %v1432 = vmul.f32 %v287, %v1341
      %v1433 = vmul.f32 %v288, %v1341
      %v1434 = vmul.f32 %v289, %v1341
      %v1435 = vmul.f32 %v290, %v1341
      %v1436 = vmul.f32 %v291, %v1341
      %v1437 = vmul.f32 %v292, %v1341
      %v1438 = vmul.f32 %v293, %v1341
      %v1439 = vmul.f32 %v294, %v1341
      %v1440 = vmul.f32 %v295, %v1341
      %v1441 = vmul.f32 %v296, %v1341
      %v1442 = vmul.f32 %v297, %v1341
      %v1443 = vmul.f32 %v298, %v1346
      %v1444 = vmul.f32 %v299, %v1346
      %v1445 = vmul.f32 %v300, %v1346
      %v1446 = vmul.f32 %v301, %v1346
      %v1447 = vmul.f32 %v302, %v1346
      %v1448 = vmul.f32 %v303, %v1346
      %v1449 = vmul.f32 %v304, %v1346
      %v1450 = vmul.f32 %v305, %v1346
      %v1451 = vmul.f32 %v306, %v1346
      %v1452 = vmul.f32 %v307, %v1346
      %v1453 = vmul.f32 %v308, %v1346
      %v1454 = vmul.f32 %v309, %v1346
      %v1455 = vmul.f32 %v310, %v1346
      %v1456 = vmul.f32 %v311, %v1346
      %v1457 = vmul.f32 %v312, %v1346
      %v1458 = vmul.f32 %v313, %v1346
      %v1459 = vmul.f32 %v314, %v1346
      %v1460 = vmul.f32 %v315, %v1346
      %v1461 = vmul.f32 %v316, %v1346
      %v1462 = vmul.f32 %v317, %v1346
      %v1463 = vmul.f32 %v318, %v1346
      %v1464 = vmul.f32 %v319, %v1346
      %v1465 = vmul.f32 %v320, %v1346
      %v1466 = vmul.f32 %v321, %v1346
      %v1467 = vmul.f32 %v322, %v1346
      %v1468 = vmul.f32 %v323, %v1351
      %v1469 = vmul.f32 %v324, %v1351
      %v1470 = vmul.f32 %v325, %v1351
      %v1471 = vmul.f32 %v326, %v1351
      %v1472 = vmul.f32 %v327, %v1351
      %v1473 = vmul.f32 %v328, %v1351
      %v1474 = vmul.f32 %v329, %v1351
      %v1475 = vmul.f32 %v330, %v1351
      %v1476 = vmul.f32 %v331, %v1351
      %v1477 = vmul.f32 %v332, %v1351
      %v1478 = vmul.f32 %v333, %v1351
      %v1479 = vmul.f32 %v334, %v1351
      %v1480 = vmul.f32 %v335, %v1351
      %v1481 = vmul.f32 %v336, %v1351
      %v1482 = vmul.f32 %v337, %v1351
      %v1483 = vmul.f32 %v338, %v1351
      %v1484 = vmul.f32 %v339, %v1351
      %v1485 = vmul.f32 %v340, %v1351
      %v1486 = vmul.f32 %v341, %v1351
      %v1487 = vmul.f32 %v342, %v1351
      %v1488 = vmul.f32 %v343, %v1351
      %v1489 = vmul.f32 %v344, %v1351
      %v1490 = vmul.f32 %v345, %v1351
      %v1491 = vmul.f32 %v346, %v1351
      %v1492 = vmul.f32 %v347, %v1351
      %v1493 = vmul.f32 %v348, %v1356
      %v1494 = vmul.f32 %v349, %v1356
      %v1495 = vmul.f32 %v350, %v1356
      %v1496 = vmul.f32 %v351, %v1356
      %v1497 = vmul.f32 %v352, %v1356
      %v1498 = vmul.f32 %v353, %v1356
      %v1499 = vmul.f32 %v354, %v1356
      %v1500 = vmul.f32 %v355, %v1356
      %v1501 = vmul.f32 %v356, %v1356
      %v1502 = vmul.f32 %v357, %v1356
      %v1503 = vmul.f32 %v358, %v1356
      %v1504 = vmul.f32 %v359, %v1356
      %v1505 = vmul.f32 %v360, %v1356
      %v1506 = vmul.f32 %v361, %v1356
      %v1507 = vmul.f32 %v362, %v1356
      %v1508 = vmul.f32 %v363, %v1356
      %v1509 = vmul.f32 %v364, %v1356
      %v1510 = vmul.f32 %v365, %v1356
      %v1511 = vmul.f32 %v366, %v1356
      %v1512 = vmul.f32 %v367, %v1356
      %v1513 = vmul.f32 %v368, %v1356
      %v1514 = vmul.f32 %v369, %v1356
      %v1515 = vmul.f32 %v370, %v1356
      %v1516 = vmul.f32 %v371, %v1356
      %v1517 = vmul.f32 %v372, %v1356
      %v1518 = vmul.f32 %v373, %v1361
      %v1519 = vmul.f32 %v374, %v1361
      %v1520 = vmul.f32 %v375, %v1361
      %v1521 = vmul.f32 %v376, %v1361
      %v1522 = vmul.f32 %v377, %v1361
      %v1523 = vmul.f32 %v378, %v1361
      %v1524 = vmul.f32 %v379, %v1361
      %v1525 = vmul.f32 %v380, %v1361
      %v1526 = vmul.f32 %v381, %v1361
      %v1527 = vmul.f32 %v382, %v1361
      %v1528 = vmul.f32 %v383, %v1361
      %v1529 = vmul.f32 %v384, %v1361
      %v1530 = vmul.f32 %v385, %v1361
      %v1531 = vmul.f32 %v386, %v1361
      %v1532 = vmul.f32 %v387, %v1361
      %v1533 = vmul.f32 %v388, %v1361
      %v1534 = vmul.f32 %v389, %v1361
      %v1535 = vmul.f32 %v390, %v1361
      %v1536 = vmul.f32 %v391, %v1361
      %v1537 = vmul.f32 %v392, %v1361
      %v1538 = vmul.f32 %v393, %v1361
      %v1539 = vmul.f32 %v394, %v1361
      %v1540 = vmul.f32 %v395, %v1361
      %v1541 = vmul.f32 %v396, %v1361
      %v1542 = vmul.f32 %v397, %v1361
      %v1543 = vmul.f32 %v398, %v1366
      %v1544 = vmul.f32 %v399, %v1366
      %v1545 = vmul.f32 %v400, %v1366
      %v1546 = vmul.f32 %v401, %v1366
      %v1547 = vmul.f32 %v402, %v1366
      %v1548 = vmul.f32 %v403, %v1366
      %v1549 = vmul.f32 %v404, %v1366
      %v1550 = vmul.f32 %v405, %v1366
      %v1551 = vmul.f32 %v406, %v1366
      %v1552 = vmul.f32 %v407, %v1366
      %v1553 = vmul.f32 %v408, %v1366
      %v1554 = vmul.f32 %v409, %v1366
      %v1555 = vmul.f32 %v410, %v1366
      %v1556 = vmul.f32 %v411, %v1366
      %v1557 = vmul.f32 %v412, %v1366
      %v1558 = vmul.f32 %v413, %v1366
      %v1559 = vmul.f32 %v414, %v1366
      %v1560 = vmul.f32 %v415, %v1366
      %v1561 = vmul.f32 %v416, %v1366
      %v1562 = vmul.f32 %v417, %v1366
      %v1563 = vmul.f32 %v418, %v1366
      %v1564 = vmul.f32 %v419, %v1366
      %v1565 = vmul.f32 %v420, %v1366
      %v1566 = vmul.f32 %v421, %v1366
      %v1567 = vmul.f32 %v422, %v1366
      %1569 = vset.pattern.permute.xlu0 0
      %1570 = vperm.xlu0 %1569, %v1320
      %v1571 = vpop.permute.xlu0 %1570
      %1574 = vset.pattern.permute.xlu0 0
      %1575 = vperm.xlu0 %1574, %v1321
      %v1576 = vpop.permute.xlu0 %1575
      %1579 = vset.pattern.permute.xlu0 0
      %1580 = vperm.xlu0 %1579, %v1322
      %v1581 = vpop.permute.xlu0 %1580
      %1584 = vset.pattern.permute.xlu0 0
      %1585 = vperm.xlu0 %1584, %v1323
      %v1586 = vpop.permute.xlu0 %1585
      %1589 = vset.pattern.permute.xlu0 0
      %1590 = vperm.xlu0 %1589, %v1324
      %v1591 = vpop.permute.xlu0 %1590
      %1594 = vset.pattern.permute.xlu0 0
      %1595 = vperm.xlu0 %1594, %v1325
      %v1596 = vpop.permute.xlu0 %1595
      %1599 = vset.pattern.permute.xlu0 0
      %1600 = vperm.xlu0 %1599, %v1326
      %v1601 = vpop.permute.xlu0 %1600
      %1604 = vset.pattern.permute.xlu0 0
      %1605 = vperm.xlu0 %1604, %v1327
      %v1606 = vpop.permute.xlu0 %1605
      %v1608 = vadd.f32 %v1368, %v1571
      %v1609 = vadd.f32 %v1369, %v1571
      %v1610 = vadd.f32 %v1370, %v1571
      %v1611 = vadd.f32 %v1371, %v1571
      %v1612 = vadd.f32 %v1372, %v1571
      %v1613 = vadd.f32 %v1373, %v1571
      %v1614 = vadd.f32 %v1374, %v1571
      %v1615 = vadd.f32 %v1375, %v1571
      %v1616 = vadd.f32 %v1376, %v1571
      %v1617 = vadd.f32 %v1377, %v1571
      %v1618 = vadd.f32 %v1378, %v1571
      %v1619 = vadd.f32 %v1379, %v1571
      %v1620 = vadd.f32 %v1380, %v1571
      %v1621 = vadd.f32 %v1381, %v1571
      %v1622 = vadd.f32 %v1382, %v1571
      %v1623 = vadd.f32 %v1383, %v1571
      %v1624 = vadd.f32 %v1384, %v1571
      %v1625 = vadd.f32 %v1385, %v1571
      %v1626 = vadd.f32 %v1386, %v1571
      %v1627 = vadd.f32 %v1387, %v1571
      %v1628 = vadd.f32 %v1388, %v1571
      %v1629 = vadd.f32 %v1389, %v1571
      %v1630 = vadd.f32 %v1390, %v1571
      %v1631 = vadd.f32 %v1391, %v1571
      %v1632 = vadd.f32 %v1392, %v1571
      %v1633 = vadd.f32 %v1393, %v1576
      %v1634 = vadd.f32 %v1394, %v1576
      %v1635 = vadd.f32 %v1395, %v1576
      %v1636 = vadd.f32 %v1396, %v1576
      %v1637 = vadd.f32 %v1397, %v1576
      %v1638 = vadd.f32 %v1398, %v1576
      %v1639 = vadd.f32 %v1399, %v1576
      %v1640 = vadd.f32 %v1400, %v1576
      %v1641 = vadd.f32 %v1401, %v1576
      %v1642 = vadd.f32 %v1402, %v1576
      %v1643 = vadd.f32 %v1403, %v1576
      %v1644 = vadd.f32 %v1404, %v1576
      %v1645 = vadd.f32 %v1405, %v1576
      %v1646 = vadd.f32 %v1406, %v1576
      %v1647 = vadd.f32 %v1407, %v1576
      %v1648 = vadd.f32 %v1408, %v1576
      %v1649 = vadd.f32 %v1409, %v1576
      %v1650 = vadd.f32 %v1410, %v1576
      %v1651 = vadd.f32 %v1411, %v1576
      %v1652 = vadd.f32 %v1412, %v1576
      %v1653 = vadd.f32 %v1413, %v1576
      %v1654 = vadd.f32 %v1414, %v1576
      %v1655 = vadd.f32 %v1415, %v1576
      %v1656 = vadd.f32 %v1416, %v1576
      %v1657 = vadd.f32 %v1417, %v1576
      %v1658 = vadd.f32 %v1418, %v1581
      %v1659 = vadd.f32 %v1419, %v1581
      %v1660 = vadd.f32 %v1420, %v1581
      %v1661 = vadd.f32 %v1421, %v1581
      %v1662 = vadd.f32 %v1422, %v1581
      %v1663 = vadd.f32 %v1423, %v1581
      %v1664 = vadd.f32 %v1424, %v1581
      %v1665 = vadd.f32 %v1425, %v1581
      %v1666 = vadd.f32 %v1426, %v1581
      %v1667 = vadd.f32 %v1427, %v1581
      %v1668 = vadd.f32 %v1428, %v1581
      %v1669 = vadd.f32 %v1429, %v1581
      %v1670 = vadd.f32 %v1430, %v1581
      %v1671 = vadd.f32 %v1431, %v1581
      %v1672 = vadd.f32 %v1432, %v1581
      %v1673 = vadd.f32 %v1433, %v1581
      %v1674 = vadd.f32 %v1434, %v1581
      %v1675 = vadd.f32 %v1435, %v1581
      %v1676 = vadd.f32 %v1436, %v1581
      %v1677 = vadd.f32 %v1437, %v1581
      %v1678 = vadd.f32 %v1438, %v1581
      %v1679 = vadd.f32 %v1439, %v1581
      %v1680 = vadd.f32 %v1440, %v1581
      %v1681 = vadd.f32 %v1441, %v1581
      %v1682 = vadd.f32 %v1442, %v1581
      %v1683 = vadd.f32 %v1443, %v1586
      %v1684 = vadd.f32 %v1444, %v1586
      %v1685 = vadd.f32 %v1445, %v1586
      %v1686 = vadd.f32 %v1446, %v1586
      %v1687 = vadd.f32 %v1447, %v1586
      %v1688 = vadd.f32 %v1448, %v1586
      %v1689 = vadd.f32 %v1449, %v1586
      %v1690 = vadd.f32 %v1450, %v1586
      %v1691 = vadd.f32 %v1451, %v1586
      %v1692 = vadd.f32 %v1452, %v1586
      %v1693 = vadd.f32 %v1453, %v1586
      %v1694 = vadd.f32 %v1454, %v1586
      %v1695 = vadd.f32 %v1455, %v1586
      %v1696 = vadd.f32 %v1456, %v1586
      %v1697 = vadd.f32 %v1457, %v1586
      %v1698 = vadd.f32 %v1458, %v1586
      %v1699 = vadd.f32 %v1459, %v1586
      %v1700 = vadd.f32 %v1460, %v1586
      %v1701 = vadd.f32 %v1461, %v1586
      %v1702 = vadd.f32 %v1462, %v1586
      %v1703 = vadd.f32 %v1463, %v1586
      %v1704 = vadd.f32 %v1464, %v1586
      %v1705 = vadd.f32 %v1465, %v1586
      %v1706 = vadd.f32 %v1466, %v1586
      %v1707 = vadd.f32 %v1467, %v1586
      %v1708 = vadd.f32 %v1468, %v1591
      %v1709 = vadd.f32 %v1469, %v1591
      %v1710 = vadd.f32 %v1470, %v1591
      %v1711 = vadd.f32 %v1471, %v1591
      %v1712 = vadd.f32 %v1472, %v1591
      %v1713 = vadd.f32 %v1473, %v1591
      %v1714 = vadd.f32 %v1474, %v1591
      %v1715 = vadd.f32 %v1475, %v1591
      %v1716 = vadd.f32 %v1476, %v1591
      %v1717 = vadd.f32 %v1477, %v1591
      %v1718 = vadd.f32 %v1478, %v1591
      %v1719 = vadd.f32 %v1479, %v1591
      %v1720 = vadd.f32 %v1480, %v1591
      %v1721 = vadd.f32 %v1481, %v1591
      %v1722 = vadd.f32 %v1482, %v1591
      %v1723 = vadd.f32 %v1483, %v1591
      %v1724 = vadd.f32 %v1484, %v1591
      %v1725 = vadd.f32 %v1485, %v1591
      %v1726 = vadd.f32 %v1486, %v1591
      %v1727 = vadd.f32 %v1487, %v1591
      %v1728 = vadd.f32 %v1488, %v1591
      %v1729 = vadd.f32 %v1489, %v1591
      %v1730 = vadd.f32 %v1490, %v1591
      %v1731 = vadd.f32 %v1491, %v1591
      %v1732 = vadd.f32 %v1492, %v1591
      %v1733 = vadd.f32 %v1493, %v1596
      %v1734 = vadd.f32 %v1494, %v1596
      %v1735 = vadd.f32 %v1495, %v1596
      %v1736 = vadd.f32 %v1496, %v1596
      %v1737 = vadd.f32 %v1497, %v1596
      %v1738 = vadd.f32 %v1498, %v1596
      %v1739 = vadd.f32 %v1499, %v1596
      %v1740 = vadd.f32 %v1500, %v1596
      %v1741 = vadd.f32 %v1501, %v1596
      %v1742 = vadd.f32 %v1502, %v1596
      %v1743 = vadd.f32 %v1503, %v1596
      %v1744 = vadd.f32 %v1504, %v1596
      %v1745 = vadd.f32 %v1505, %v1596
      %v1746 = vadd.f32 %v1506, %v1596
      %v1747 = vadd.f32 %v1507, %v1596
      %v1748 = vadd.f32 %v1508, %v1596
      %v1749 = vadd.f32 %v1509, %v1596
      %v1750 = vadd.f32 %v1510, %v1596
      %v1751 = vadd.f32 %v1511, %v1596
      %v1752 = vadd.f32 %v1512, %v1596
      %v1753 = vadd.f32 %v1513, %v1596
      %v1754 = vadd.f32 %v1514, %v1596
      %v1755 = vadd.f32 %v1515, %v1596
      %v1756 = vadd.f32 %v1516, %v1596
      %v1757 = vadd.f32 %v1517, %v1596
      %v1758 = vadd.f32 %v1518, %v1601
      %v1759 = vadd.f32 %v1519, %v1601
      %v1760 = vadd.f32 %v1520, %v1601
      %v1761 = vadd.f32 %v1521, %v1601
      %v1762 = vadd.f32 %v1522, %v1601
      %v1763 = vadd.f32 %v1523, %v1601
      %v1764 = vadd.f32 %v1524, %v1601
      %v1765 = vadd.f32 %v1525, %v1601
      %v1766 = vadd.f32 %v1526, %v1601
      %v1767 = vadd.f32 %v1527, %v1601
      %v1768 = vadd.f32 %v1528, %v1601
      %v1769 = vadd.f32 %v1529, %v1601
      %v1770 = vadd.f32 %v1530, %v1601
      %v1771 = vadd.f32 %v1531, %v1601
      %v1772 = vadd.f32 %v1532, %v1601
      %v1773 = vadd.f32 %v1533, %v1601
      %v1774 = vadd.f32 %v1534, %v1601
      %v1775 = vadd.f32 %v1535, %v1601
      %v1776 = vadd.f32 %v1536, %v1601
      %v1777 = vadd.f32 %v1537, %v1601
      %v1778 = vadd.f32 %v1538, %v1601
      %v1779 = vadd.f32 %v1539, %v1601
      %v1780 = vadd.f32 %v1540, %v1601
      %v1781 = vadd.f32 %v1541, %v1601
      %v1782 = vadd.f32 %v1542, %v1601
      %v1783 = vadd.f32 %v1543, %v1606
      %v1784 = vadd.f32 %v1544, %v1606
      %v1785 = vadd.f32 %v1545, %v1606
      %v1786 = vadd.f32 %v1546, %v1606
      %v1787 = vadd.f32 %v1547, %v1606
      %v1788 = vadd.f32 %v1548, %v1606
      %v1789 = vadd.f32 %v1549, %v1606
      %v1790 = vadd.f32 %v1550, %v1606
      %v1791 = vadd.f32 %v1551, %v1606
      %v1792 = vadd.f32 %v1552, %v1606
      %v1793 = vadd.f32 %v1553, %v1606
      %v1794 = vadd.f32 %v1554, %v1606
      %v1795 = vadd.f32 %v1555, %v1606
      %v1796 = vadd.f32 %v1556, %v1606
      %v1797 = vadd.f32 %v1557, %v1606
      %v1798 = vadd.f32 %v1558, %v1606
      %v1799 = vadd.f32 %v1559, %v1606
      %v1800 = vadd.f32 %v1560, %v1606
      %v1801 = vadd.f32 %v1561, %v1606
      %v1802 = vadd.f32 %v1562, %v1606
      %v1803 = vadd.f32 %v1563, %v1606
      %v1804 = vadd.f32 %v1564, %v1606
      %v1805 = vadd.f32 %v1565, %v1606
      %v1806 = vadd.f32 %v1566, %v1606
      %v1807 = vadd.f32 %v1567, %v1606
      %v1808 = vmax.f32 %v1608, 0.0
      %v1809 = vmax.f32 %v1609, 0.0
      %v1810 = vmax.f32 %v1610, 0.0
      %v1811 = vmax.f32 %v1611, 0.0
      %v1812 = vmax.f32 %v1612, 0.0
      %v1813 = vmax.f32 %v1613, 0.0
      %v1814 = vmax.f32 %v1614, 0.0
      %v1815 = vmax.f32 %v1615, 0.0
      %v1816 = vmax.f32 %v1616, 0.0
      %v1817 = vmax.f32 %v1617, 0.0
      %v1818 = vmax.f32 %v1618, 0.0
      %v1819 = vmax.f32 %v1619, 0.0
      %v1820 = vmax.f32 %v1620, 0.0
      %v1821 = vmax.f32 %v1621, 0.0
      %v1822 = vmax.f32 %v1622, 0.0
      %v1823 = vmax.f32 %v1623, 0.0
      %v1824 = vmax.f32 %v1624, 0.0
      %v1825 = vmax.f32 %v1625, 0.0
      %v1826 = vmax.f32 %v1626, 0.0
      %v1827 = vmax.f32 %v1627, 0.0
      %v1828 = vmax.f32 %v1628, 0.0
      %v1829 = vmax.f32 %v1629, 0.0
      %v1830 = vmax.f32 %v1630, 0.0
      %v1831 = vmax.f32 %v1631, 0.0
      %v1832 = vmax.f32 %v1632, 0.0
      %v1833 = vmax.f32 %v1633, 0.0
      %v1834 = vmax.f32 %v1634, 0.0
      %v1835 = vmax.f32 %v1635, 0.0
      %v1836 = vmax.f32 %v1636, 0.0
      %v1837 = vmax.f32 %v1637, 0.0
      %v1838 = vmax.f32 %v1638, 0.0
      %v1839 = vmax.f32 %v1639, 0.0
      %v1840 = vmax.f32 %v1640, 0.0
      %v1841 = vmax.f32 %v1641, 0.0
      %v1842 = vmax.f32 %v1642, 0.0
      %v1843 = vmax.f32 %v1643, 0.0
      %v1844 = vmax.f32 %v1644, 0.0
      %v1845 = vmax.f32 %v1645, 0.0
      %v1846 = vmax.f32 %v1646, 0.0
      %v1847 = vmax.f32 %v1647, 0.0
      %v1848 = vmax.f32 %v1648, 0.0
      %v1849 = vmax.f32 %v1649, 0.0
      %v1850 = vmax.f32 %v1650, 0.0
      %v1851 = vmax.f32 %v1651, 0.0
      %v1852 = vmax.f32 %v1652, 0.0
      %v1853 = vmax.f32 %v1653, 0.0
      %v1854 = vmax.f32 %v1654, 0.0
      %v1855 = vmax.f32 %v1655, 0.0
      %v1856 = vmax.f32 %v1656, 0.0
      %v1857 = vmax.f32 %v1657, 0.0
      %v1858 = vmax.f32 %v1658, 0.0
      %v1859 = vmax.f32 %v1659, 0.0
      %v1860 = vmax.f32 %v1660, 0.0
      %v1861 = vmax.f32 %v1661, 0.0
      %v1862 = vmax.f32 %v1662, 0.0
      %v1863 = vmax.f32 %v1663, 0.0
      %v1864 = vmax.f32 %v1664, 0.0
      %v1865 = vmax.f32 %v1665, 0.0
      %v1866 = vmax.f32 %v1666, 0.0
      %v1867 = vmax.f32 %v1667, 0.0
      %v1868 = vmax.f32 %v1668, 0.0
      %v1869 = vmax.f32 %v1669, 0.0
      %v1870 = vmax.f32 %v1670, 0.0
      %v1871 = vmax.f32 %v1671, 0.0
      %v1872 = vmax.f32 %v1672, 0.0
      %v1873 = vmax.f32 %v1673, 0.0
      %v1874 = vmax.f32 %v1674, 0.0
      %v1875 = vmax.f32 %v1675, 0.0
      %v1876 = vmax.f32 %v1676, 0.0
      %v1877 = vmax.f32 %v1677, 0.0
      %v1878 = vmax.f32 %v1678, 0.0
      %v1879 = vmax.f32 %v1679, 0.0
      %v1880 = vmax.f32 %v1680, 0.0
      %v1881 = vmax.f32 %v1681, 0.0
      %v1882 = vmax.f32 %v1682, 0.0
      %v1883 = vmax.f32 %v1683, 0.0
      %v1884 = vmax.f32 %v1684, 0.0
      %v1885 = vmax.f32 %v1685, 0.0
      %v1886 = vmax.f32 %v1686, 0.0
      %v1887 = vmax.f32 %v1687, 0.0
      %v1888 = vmax.f32 %v1688, 0.0
      %v1889 = vmax.f32 %v1689, 0.0
      %v1890 = vmax.f32 %v1690, 0.0
      %v1891 = vmax.f32 %v1691, 0.0
      %v1892 = vmax.f32 %v1692, 0.0
      %v1893 = vmax.f32 %v1693, 0.0
      %v1894 = vmax.f32 %v1694, 0.0
      %v1895 = vmax.f32 %v1695, 0.0
      %v1896 = vmax.f32 %v1696, 0.0
      %v1897 = vmax.f32 %v1697, 0.0
      %v1898 = vmax.f32 %v1698, 0.0
      %v1899 = vmax.f32 %v1699, 0.0
      %v1900 = vmax.f32 %v1700, 0.0
      %v1901 = vmax.f32 %v1701, 0.0
      %v1902 = vmax.f32 %v1702, 0.0
      %v1903 = vmax.f32 %v1703, 0.0
      %v1904 = vmax.f32 %v1704, 0.0
      %v1905 = vmax.f32 %v1705, 0.0
      %v1906 = vmax.f32 %v1706, 0.0
      %v1907 = vmax.f32 %v1707, 0.0
      %v1908 = vmax.f32 %v1708, 0.0
      %v1909 = vmax.f32 %v1709, 0.0
      %v1910 = vmax.f32 %v1710, 0.0
      %v1911 = vmax.f32 %v1711, 0.0
      %v1912 = vmax.f32 %v1712, 0.0
      %v1913 = vmax.f32 %v1713, 0.0
      %v1914 = vmax.f32 %v1714, 0.0
      %v1915 = vmax.f32 %v1715, 0.0
      %v1916 = vmax.f32 %v1716, 0.0
      %v1917 = vmax.f32 %v1717, 0.0
      %v1918 = vmax.f32 %v1718, 0.0
      %v1919 = vmax.f32 %v1719, 0.0
      %v1920 = vmax.f32 %v1720, 0.0
      %v1921 = vmax.f32 %v1721, 0.0
      %v1922 = vmax.f32 %v1722, 0.0
      %v1923 = vmax.f32 %v1723, 0.0
      %v1924 = vmax.f32 %v1724, 0.0
      %v1925 = vmax.f32 %v1725, 0.0
      %v1926 = vmax.f32 %v1726, 0.0
      %v1927 = vmax.f32 %v1727, 0.0
      %v1928 = vmax.f32 %v1728, 0.0
      %v1929 = vmax.f32 %v1729, 0.0
      %v1930 = vmax.f32 %v1730, 0.0
      %v1931 = vmax.f32 %v1731, 0.0
      %v1932 = vmax.f32 %v1732, 0.0
      %v1933 = vmax.f32 %v1733, 0.0
      %v1934 = vmax.f32 %v1734, 0.0
      %v1935 = vmax.f32 %v1735, 0.0
      %v1936 = vmax.f32 %v1736, 0.0
      %v1937 = vmax.f32 %v1737, 0.0
      %v1938 = vmax.f32 %v1738, 0.0
      %v1939 = vmax.f32 %v1739, 0.0
      %v1940 = vmax.f32 %v1740, 0.0
      %v1941 = vmax.f32 %v1741, 0.0
      %v1942 = vmax.f32 %v1742, 0.0
      %v1943 = vmax.f32 %v1743, 0.0
      %v1944 = vmax.f32 %v1744, 0.0
      %v1945 = vmax.f32 %v1745, 0.0
      %v1946 = vmax.f32 %v1746, 0.0
      %v1947 = vmax.f32 %v1747, 0.0
      %v1948 = vmax.f32 %v1748, 0.0
      %v1949 = vmax.f32 %v1749, 0.0
      %v1950 = vmax.f32 %v1750, 0.0
      %v1951 = vmax.f32 %v1751, 0.0
      %v1952 = vmax.f32 %v1752, 0.0
      %v1953 = vmax.f32 %v1753, 0.0
      %v1954 = vmax.f32 %v1754, 0.0
      %v1955 = vmax.f32 %v1755, 0.0
      %v1956 = vmax.f32 %v1756, 0.0
      %v1957 = vmax.f32 %v1757, 0.0
      %v1958 = vmax.f32 %v1758, 0.0
      %v1959 = vmax.f32 %v1759, 0.0
      %v1960 = vmax.f32 %v1760, 0.0
      %v1961 = vmax.f32 %v1761, 0.0
      %v1962 = vmax.f32 %v1762, 0.0
      %v1963 = vmax.f32 %v1763, 0.0
      %v1964 = vmax.f32 %v1764, 0.0
      %v1965 = vmax.f32 %v1765, 0.0
      %v1966 = vmax.f32 %v1766, 0.0
      %v1967 = vmax.f32 %v1767, 0.0
      %v1968 = vmax.f32 %v1768, 0.0
      %v1969 = vmax.f32 %v1769, 0.0
      %v1970 = vmax.f32 %v1770, 0.0
      %v1971 = vmax.f32 %v1771, 0.0
      %v1972 = vmax.f32 %v1772, 0.0
      %v1973 = vmax.f32 %v1773, 0.0
      %v1974 = vmax.f32 %v1774, 0.0
      %v1975 = vmax.f32 %v1775, 0.0
      %v1976 = vmax.f32 %v1776, 0.0
      %v1977 = vmax.f32 %v1777, 0.0
      %v1978 = vmax.f32 %v1778, 0.0
      %v1979 = vmax.f32 %v1779, 0.0
      %v1980 = vmax.f32 %v1780, 0.0
      %v1981 = vmax.f32 %v1781, 0.0
      %v1982 = vmax.f32 %v1782, 0.0
      %v1983 = vmax.f32 %v1783, 0.0
      %v1984 = vmax.f32 %v1784, 0.0
      %v1985 = vmax.f32 %v1785, 0.0
      %v1986 = vmax.f32 %v1786, 0.0
      %v1987 = vmax.f32 %v1787, 0.0
      %v1988 = vmax.f32 %v1788, 0.0
      %v1989 = vmax.f32 %v1789, 0.0
      %v1990 = vmax.f32 %v1790, 0.0
      %v1991 = vmax.f32 %v1791, 0.0
      %v1992 = vmax.f32 %v1792, 0.0
      %v1993 = vmax.f32 %v1793, 0.0
      %v1994 = vmax.f32 %v1794, 0.0
      %v1995 = vmax.f32 %v1795, 0.0
      %v1996 = vmax.f32 %v1796, 0.0
      %v1997 = vmax.f32 %v1797, 0.0
      %v1998 = vmax.f32 %v1798, 0.0
      %v1999 = vmax.f32 %v1799, 0.0
      %v2000 = vmax.f32 %v1800, 0.0
      %v2001 = vmax.f32 %v1801, 0.0
      %v2002 = vmax.f32 %v1802, 0.0
      %v2003 = vmax.f32 %v1803, 0.0
      %v2004 = vmax.f32 %v1804, 0.0
      %v2005 = vmax.f32 %v1805, 0.0
      %v2006 = vmax.f32 %v1806, 0.0
      %v2007 = vmax.f32 %v1807, 0.0
      %2008 = vst [vmem:[%s221] sm:$0xff] %v1808
      %2009 = vst [vmem:[%s221 + $0x8] sm:$0xff] %v1809
      %2010 = vst [vmem:[%s221 + $0x10] sm:$0xff] %v1810
      %2011 = vst [vmem:[%s221 + $0x18] sm:$0xff] %v1811
      %2012 = vst [vmem:[%s221 + $0x20] sm:$0xff] %v1812
      %2013 = vst [vmem:[%s221 + $0x28] sm:$0xff] %v1813
      %2014 = vst [vmem:[%s221 + $0x30] sm:$0xff] %v1814
      %2015 = vst [vmem:[%s221 + $0x38] sm:$0xff] %v1815
      %2016 = vst [vmem:[%s221 + $0x40] sm:$0xff] %v1816
      %2017 = vst [vmem:[%s221 + $0x48] sm:$0xff] %v1817
      %2018 = vst [vmem:[%s221 + $0x50] sm:$0xff] %v1818
      %2019 = vst [vmem:[%s221 + $0x58] sm:$0xff] %v1819
      %2020 = vst [vmem:[%s221 + $0x60] sm:$0xff] %v1820
      %2021 = vst [vmem:[%s221 + $0x68] sm:$0xff] %v1821
      %2022 = vst [vmem:[%s221 + $0x70] sm:$0xff] %v1822
      %2023 = vst [vmem:[%s221 + $0x78] sm:$0xff] %v1823
      %2024 = vst [vmem:[%s221 + $0x80] sm:$0xff] %v1824
      %2025 = vst [vmem:[%s221 + $0x88] sm:$0xff] %v1825
      %2026 = vst [vmem:[%s221 + $0x90] sm:$0xff] %v1826
      %2027 = vst [vmem:[%s221 + $0x98] sm:$0xff] %v1827
      %2028 = vst [vmem:[%s221 + $0xa0] sm:$0xff] %v1828
      %2029 = vst [vmem:[%s221 + $0xa8] sm:$0xff] %v1829
      %2030 = vst [vmem:[%s221 + $0xb0] sm:$0xff] %v1830
      %2031 = vst [vmem:[%s221 + $0xb8] sm:$0xff] %v1831
      %2032 = vst.msk [vmem:[%s221 + $0xc0] sm:$0xff] %vm446, %v1832
      %2033 = vst [vmem:[%s221 + $0xc8] sm:$0xff] %v1833
      %2034 = vst [vmem:[%s221 + $0xd0] sm:$0xff] %v1834
      %2035 = vst [vmem:[%s221 + $0xd8] sm:$0xff] %v1835
      %2036 = vst [vmem:[%s221 + $0xe0] sm:$0xff] %v1836
      %2037 = vst [vmem:[%s221 + $0xe8] sm:$0xff] %v1837
      %2038 = vst [vmem:[%s221 + $0xf0] sm:$0xff] %v1838
      %2039 = vst [vmem:[%s221 + $0xf8] sm:$0xff] %v1839
      %2040 = vst [vmem:[%s221 + $0x100] sm:$0xff] %v1840
      %2041 = vst [vmem:[%s221 + $0x108] sm:$0xff] %v1841
      %2042 = vst [vmem:[%s221 + $0x110] sm:$0xff] %v1842
      %2043 = vst [vmem:[%s221 + $0x118] sm:$0xff] %v1843
      %2044 = vst [vmem:[%s221 + $0x120] sm:$0xff] %v1844
      %2045 = vst [vmem:[%s221 + $0x128] sm:$0xff] %v1845
      %2046 = vst [vmem:[%s221 + $0x130] sm:$0xff] %v1846
      %2047 = vst [vmem:[%s221 + $0x138] sm:$0xff] %v1847
      %2048 = vst [vmem:[%s221 + $0x140] sm:$0xff] %v1848
      %2049 = vst [vmem:[%s221 + $0x148] sm:$0xff] %v1849
      %2050 = vst [vmem:[%s221 + $0x150] sm:$0xff] %v1850
      %2051 = vst [vmem:[%s221 + $0x158] sm:$0xff] %v1851
      %2052 = vst [vmem:[%s221 + $0x160] sm:$0xff] %v1852
      %2053 = vst [vmem:[%s221 + $0x168] sm:$0xff] %v1853
      %2054 = vst [vmem:[%s221 + $0x170] sm:$0xff] %v1854
      %2055 = vst [vmem:[%s221 + $0x178] sm:$0xff] %v1855
      %2056 = vst [vmem:[%s221 + $0x180] sm:$0xff] %v1856
      %2057 = vst.msk [vmem:[%s221 + $0x188] sm:$0xff] %vm446, %v1857
      %2058 = vst [vmem:[%s221 + $0x190] sm:$0xff] %v1858
      %2059 = vst [vmem:[%s221 + $0x198] sm:$0xff] %v1859
      %2060 = vst [vmem:[%s221 + $0x1a0] sm:$0xff] %v1860
      %2061 = vst [vmem:[%s221 + $0x1a8] sm:$0xff] %v1861
      %2062 = vst [vmem:[%s221 + $0x1b0] sm:$0xff] %v1862
      %2063 = vst [vmem:[%s221 + $0x1b8] sm:$0xff] %v1863
      %2064 = vst [vmem:[%s221 + $0x1c0] sm:$0xff] %v1864
      %2065 = vst [vmem:[%s221 + $0x1c8] sm:$0xff] %v1865
      %2066 = vst [vmem:[%s221 + $0x1d0] sm:$0xff] %v1866
      %2067 = vst [vmem:[%s221 + $0x1d8] sm:$0xff] %v1867
      %2068 = vst [vmem:[%s221 + $0x1e0] sm:$0xff] %v1868
      %2069 = vst [vmem:[%s221 + $0x1e8] sm:$0xff] %v1869
      %2070 = vst [vmem:[%s221 + $0x1f0] sm:$0xff] %v1870
      %2071 = vst [vmem:[%s221 + $0x1f8] sm:$0xff] %v1871
      %2072 = vst [vmem:[%s221 + $0x200] sm:$0xff] %v1872
      %2073 = vst [vmem:[%s221 + $0x208] sm:$0xff] %v1873
      %2074 = vst [vmem:[%s221 + $0x210] sm:$0xff] %v1874
      %2075 = vst [vmem:[%s221 + $0x218] sm:$0xff] %v1875
      %2076 = vst [vmem:[%s221 + $0x220] sm:$0xff] %v1876
      %2077 = vst [vmem:[%s221 + $0x228] sm:$0xff] %v1877
      %2078 = vst [vmem:[%s221 + $0x230] sm:$0xff] %v1878
      %2079 = vst [vmem:[%s221 + $0x238] sm:$0xff] %v1879
      %2080 = vst [vmem:[%s221 + $0x240] sm:$0xff] %v1880
      %2081 = vst [vmem:[%s221 + $0x248] sm:$0xff] %v1881
      %2082 = vst.msk [vmem:[%s221 + $0x250] sm:$0xff] %vm446, %v1882
      %2083 = vst [vmem:[%s221 + $0x258] sm:$0xff] %v1883
      %2084 = vst [vmem:[%s221 + $0x260] sm:$0xff] %v1884
      %2085 = vst [vmem:[%s221 + $0x268] sm:$0xff] %v1885
      %2086 = vst [vmem:[%s221 + $0x270] sm:$0xff] %v1886
      %2087 = vst [vmem:[%s221 + $0x278] sm:$0xff] %v1887
      %2088 = vst [vmem:[%s221 + $0x280] sm:$0xff] %v1888
      %2089 = vst [vmem:[%s221 + $0x288] sm:$0xff] %v1889
      %2090 = vst [vmem:[%s221 + $0x290] sm:$0xff] %v1890
      %2091 = vst [vmem:[%s221 + $0x298] sm:$0xff] %v1891
      %2092 = vst [vmem:[%s221 + $0x2a0] sm:$0xff] %v1892
      %2093 = vst [vmem:[%s221 + $0x2a8] sm:$0xff] %v1893
      %2094 = vst [vmem:[%s221 + $0x2b0] sm:$0xff] %v1894
      %2095 = vst [vmem:[%s221 + $0x2b8] sm:$0xff] %v1895
      %2096 = vst [vmem:[%s221 + $0x2c0] sm:$0xff] %v1896
      %2097 = vst [vmem:[%s221 + $0x2c8] sm:$0xff] %v1897
      %2098 = vst [vmem:[%s221 + $0x2d0] sm:$0xff] %v1898
      %2099 = vst [vmem:[%s221 + $0x2d8] sm:$0xff] %v1899
      %2100 = vst [vmem:[%s221 + $0x2e0] sm:$0xff] %v1900
      %2101 = vst [vmem:[%s221 + $0x2e8] sm:$0xff] %v1901
      %2102 = vst [vmem:[%s221 + $0x2f0] sm:$0xff] %v1902
      %2103 = vst [vmem:[%s221 + $0x2f8] sm:$0xff] %v1903
      %2104 = vst [vmem:[%s221 + $0x300] sm:$0xff] %v1904
      %2105 = vst [vmem:[%s221 + $0x308] sm:$0xff] %v1905
      %2106 = vst [vmem:[%s221 + $0x310] sm:$0xff] %v1906
      %2107 = vst.msk [vmem:[%s221 + $0x318] sm:$0xff] %vm446, %v1907
      %2108 = vst [vmem:[%s221 + $0x320] sm:$0xff] %v1908
      %2109 = vst [vmem:[%s221 + $0x328] sm:$0xff] %v1909
      %2110 = vst [vmem:[%s221 + $0x330] sm:$0xff] %v1910
      %2111 = vst [vmem:[%s221 + $0x338] sm:$0xff] %v1911
      %2112 = vst [vmem:[%s221 + $0x340] sm:$0xff] %v1912
      %2113 = vst [vmem:[%s221 + $0x348] sm:$0xff] %v1913
      %2114 = vst [vmem:[%s221 + $0x350] sm:$0xff] %v1914
      %2115 = vst [vmem:[%s221 + $0x358] sm:$0xff] %v1915
      %2116 = vst [vmem:[%s221 + $0x360] sm:$0xff] %v1916
      %2117 = vst [vmem:[%s221 + $0x368] sm:$0xff] %v1917
      %2118 = vst [vmem:[%s221 + $0x370] sm:$0xff] %v1918
      %2119 = vst [vmem:[%s221 + $0x378] sm:$0xff] %v1919
      %2120 = vst [vmem:[%s221 + $0x380] sm:$0xff] %v1920
      %2121 = vst [vmem:[%s221 + $0x388] sm:$0xff] %v1921
      %2122 = vst [vmem:[%s221 + $0x390] sm:$0xff] %v1922
      %2123 = vst [vmem:[%s221 + $0x398] sm:$0xff] %v1923
      %2124 = vst [vmem:[%s221 + $0x3a0] sm:$0xff] %v1924
      %2125 = vst [vmem:[%s221 + $0x3a8] sm:$0xff] %v1925
      %2126 = vst [vmem:[%s221 + $0x3b0] sm:$0xff] %v1926
      %2127 = vst [vmem:[%s221 + $0x3b8] sm:$0xff] %v1927
      %2128 = vst [vmem:[%s221 + $0x3c0] sm:$0xff] %v1928
      %2129 = vst [vmem:[%s221 + $0x3c8] sm:$0xff] %v1929
      %2130 = vst [vmem:[%s221 + $0x3d0] sm:$0xff] %v1930
      %2131 = vst [vmem:[%s221 + $0x3d8] sm:$0xff] %v1931
      %2132 = vst.msk [vmem:[%s221 + $0x3e0] sm:$0xff] %vm446, %v1932
      %2133 = vst [vmem:[%s221 + $0x3e8] sm:$0xff] %v1933
      %2134 = vst [vmem:[%s221 + $0x3f0] sm:$0xff] %v1934
      %2135 = vst [vmem:[%s221 + $0x3f8] sm:$0xff] %v1935
      %2136 = vst [vmem:[%s221 + $0x400] sm:$0xff] %v1936
      %2137 = vst [vmem:[%s221 + $0x408] sm:$0xff] %v1937
      %2138 = vst [vmem:[%s221 + $0x410] sm:$0xff] %v1938
      %2139 = vst [vmem:[%s221 + $0x418] sm:$0xff] %v1939
      %2140 = vst [vmem:[%s221 + $0x420] sm:$0xff] %v1940
      %2141 = vst [vmem:[%s221 + $0x428] sm:$0xff] %v1941
      %2142 = vst [vmem:[%s221 + $0x430] sm:$0xff] %v1942
      %2143 = vst [vmem:[%s221 + $0x438] sm:$0xff] %v1943
      %2144 = vst [vmem:[%s221 + $0x440] sm:$0xff] %v1944
      %2145 = vst [vmem:[%s221 + $0x448] sm:$0xff] %v1945
      %2146 = vst [vmem:[%s221 + $0x450] sm:$0xff] %v1946
      %2147 = vst [vmem:[%s221 + $0x458] sm:$0xff] %v1947
      %2148 = vst [vmem:[%s221 + $0x460] sm:$0xff] %v1948
      %2149 = vst [vmem:[%s221 + $0x468] sm:$0xff] %v1949
      %2150 = vst [vmem:[%s221 + $0x470] sm:$0xff] %v1950
      %2151 = vst [vmem:[%s221 + $0x478] sm:$0xff] %v1951
      %2152 = vst [vmem:[%s221 + $0x480] sm:$0xff] %v1952
      %2153 = vst [vmem:[%s221 + $0x488] sm:$0xff] %v1953
      %2154 = vst [vmem:[%s221 + $0x490] sm:$0xff] %v1954
      %2155 = vst [vmem:[%s221 + $0x498] sm:$0xff] %v1955
      %2156 = vst [vmem:[%s221 + $0x4a0] sm:$0xff] %v1956
      %2157 = vst.msk [vmem:[%s221 + $0x4a8] sm:$0xff] %vm446, %v1957
      %2158 = vst [vmem:[%s221 + $0x4b0] sm:$0xff] %v1958
      %2159 = vst [vmem:[%s221 + $0x4b8] sm:$0xff] %v1959
      %2160 = vst [vmem:[%s221 + $0x4c0] sm:$0xff] %v1960
      %2161 = vst [vmem:[%s221 + $0x4c8] sm:$0xff] %v1961
      %2162 = vst [vmem:[%s221 + $0x4d0] sm:$0xff] %v1962
      %2163 = vst [vmem:[%s221 + $0x4d8] sm:$0xff] %v1963
      %2164 = vst [vmem:[%s221 + $0x4e0] sm:$0xff] %v1964
      %2165 = vst [vmem:[%s221 + $0x4e8] sm:$0xff] %v1965
      %2166 = vst [vmem:[%s221 + $0x4f0] sm:$0xff] %v1966
      %2167 = vst [vmem:[%s221 + $0x4f8] sm:$0xff] %v1967
      %2168 = vst [vmem:[%s221 + $0x500] sm:$0xff] %v1968
      %2169 = vst [vmem:[%s221 + $0x508] sm:$0xff] %v1969
      %2170 = vst [vmem:[%s221 + $0x510] sm:$0xff] %v1970
      %2171 = vst [vmem:[%s221 + $0x518] sm:$0xff] %v1971
      %2172 = vst [vmem:[%s221 + $0x520] sm:$0xff] %v1972
      %2173 = vst [vmem:[%s221 + $0x528] sm:$0xff] %v1973
      %2174 = vst [vmem:[%s221 + $0x530] sm:$0xff] %v1974
      %2175 = vst [vmem:[%s221 + $0x538] sm:$0xff] %v1975
      %2176 = vst [vmem:[%s221 + $0x540] sm:$0xff] %v1976
      %2177 = vst [vmem:[%s221 + $0x548] sm:$0xff] %v1977
      %2178 = vst [vmem:[%s221 + $0x550] sm:$0xff] %v1978
      %2179 = vst [vmem:[%s221 + $0x558] sm:$0xff] %v1979
      %2180 = vst [vmem:[%s221 + $0x560] sm:$0xff] %v1980
      %2181 = vst [vmem:[%s221 + $0x568] sm:$0xff] %v1981
      %2182 = vst.msk [vmem:[%s221 + $0x570] sm:$0xff] %vm446, %v1982
      %2183 = vst [vmem:[%s221 + $0x578] sm:$0xff] %v1983
      %2184 = vst [vmem:[%s221 + $0x580] sm:$0xff] %v1984
      %2185 = vst [vmem:[%s221 + $0x588] sm:$0xff] %v1985
      %2186 = vst [vmem:[%s221 + $0x590] sm:$0xff] %v1986
      %2187 = vst [vmem:[%s221 + $0x598] sm:$0xff] %v1987
      %2188 = vst [vmem:[%s221 + $0x5a0] sm:$0xff] %v1988
      %2189 = vst [vmem:[%s221 + $0x5a8] sm:$0xff] %v1989
      %2190 = vst [vmem:[%s221 + $0x5b0] sm:$0xff] %v1990
      %2191 = vst [vmem:[%s221 + $0x5b8] sm:$0xff] %v1991
      %2192 = vst [vmem:[%s221 + $0x5c0] sm:$0xff] %v1992
      %2193 = vst [vmem:[%s221 + $0x5c8] sm:$0xff] %v1993
      %2194 = vst [vmem:[%s221 + $0x5d0] sm:$0xff] %v1994
      %2195 = vst [vmem:[%s221 + $0x5d8] sm:$0xff] %v1995
      %2196 = vst [vmem:[%s221 + $0x5e0] sm:$0xff] %v1996
      %2197 = vst [vmem:[%s221 + $0x5e8] sm:$0xff] %v1997
      %2198 = vst [vmem:[%s221 + $0x5f0] sm:$0xff] %v1998
      %2199 = vst [vmem:[%s221 + $0x5f8] sm:$0xff] %v1999
      %2200 = vst [vmem:[%s221 + $0x600] sm:$0xff] %v2000
      %2201 = vst [vmem:[%s221 + $0x608] sm:$0xff] %v2001
      %2202 = vst [vmem:[%s221 + $0x610] sm:$0xff] %v2002
      %2203 = vst [vmem:[%s221 + $0x618] sm:$0xff] %v2003
      %2204 = vst [vmem:[%s221 + $0x620] sm:$0xff] %v2004
      %2205 = vst [vmem:[%s221 + $0x628] sm:$0xff] %v2005
      %2206 = vst [vmem:[%s221 + $0x630] sm:$0xff] %v2006
      %2207 = vst.msk [vmem:[%s221 + $0x638] sm:$0xff] %vm446, %v2007
      %s2208 = smul.u32 8, %s14
      %p2209 = scmp.lt.s32.totalorder %s2208, 15
      %s2210 = scalar_select %p2209, %s2208, 15
      %s2211 = smul.addr %s2210, 25
      %s2212 = smul.addr %s2211, 8
      %s2213 = scalar_lea.vmem %s3, %s2212
      // Predicated region
      $region33: #{tpu_custom_call.1} parent=31 // pred_check
        %p2214 = pneg %p110
      $region34: #{tpu_custom_call.1} parent=31 // pred_check_branch
        %2216 = sbr.rel (%p2214) target = $region36
      $region35: #{tpu_custom_call.1} parent=31 // pred_region
        %s2217 = smul.u32 8, %s14
      $region36: #{tpu_custom_call.1} parent=31 // pred_fallthru
        _
    $region32: #{tpu_custom_call.1} parent=5 // pred_fallthru
      _
    %p2218 = scmp.le.s32.totalorder 2, %s9
    // Predicated region
    $region37: #{tpu_custom_call.1} parent=5 // pred_check
      %p2219 = pneg %p2218
    $region38: #{tpu_custom_call.1} parent=5 // pred_check_branch
      %2221 = sbr.rel (%p2219) target = $region40
    $region39: #{tpu_custom_call.1} parent=5 // pred_region
      %s2222 = ssub.s32 %s9, 2
      // Predicated region
      $region41: #{tpu_custom_call.1} parent=39 // pred_check
        %p2223 = pneg %p116
      $region42: #{tpu_custom_call.1} parent=39 // pred_check_branch
        %2225 = sbr.rel (%p2223) target = $region44
      $region43: #{tpu_custom_call.1} parent=39 // pred_region
        %s2226 = smul.u32 8, %s15
        %p2227 = scmp.lt.s32.totalorder %s2226, 15
        %s2228 = scalar_select %p2227, %s2226, 15
        %s2229 = smul.addr %s2228, 25
        %s2230 = smul.addr %s2229, 8
        %s2231 = scalar_lea.vmem %s3, %s2230
      $region44: #{tpu_custom_call.1} parent=39 // pred_fallthru
        _
    $region40: #{tpu_custom_call.1} parent=5 // pred_fallthru
      _
  $region6: #{tpu_custom_call.1} parent=0 // loop_footer
    %s13 = sadd.s32 1, %s9
  $region7: #{tpu_custom_call.1} parent=0 // loop_footer_branch
    %8 = sbr.rel target = $region3
  $region8: #{tpu_custom_call.1} parent=0 // loop_exit
    _

</llo_original>
